<compile_context>
chip_gen: v7x
topology: tpu7x:2x2x1
jax: 0.10.0
libtpu: 0.0.40
codegen_flags: <defaults>
</compile_context>

<pallas_src>
import functools

import jax
import jax.numpy as jnp
from jax.experimental import pallas as pl
from jax.experimental.pallas import tpu as pltpu


def _round_up(x, m):
    return (x + m - 1) // m * m


def _dense_conv_kernel(x_ref, w_ref, b_ref, o_ref, *, th, wo_pad, cin, cout, k, p):
    # x_ref: (TH + k - 1, Wp_pad, Cin)  f32  halo'd row slab of the reflection-padded image
    # w_ref: (k*k*Cin, Cout)            bf16 im2col weight slab (rows ordered (kh, kw, ci))
    # b_ref: (1, Cout)                  f32  bias
    # o_ref: (TH, Wo_pad, Cin + Cout)   f32  [x passthrough | relu(conv + b)]
    m = th * wo_pad

    # Build the im2col LHS as a lane-concat of the k*k shifted taps -> single MXU dot
    # with contraction K = cin*k*k (one accumulator pass).
    taps = []
    for kh in range(k):
        for kw in range(k):
            t = x_ref[pl.ds(kh, th), pl.ds(kw, wo_pad), :]          # (TH, Wo_pad, Cin)
            taps.append(t.reshape(m, cin).astype(jnp.bfloat16))
    lhs = jnp.concatenate(taps, axis=-1)                            # (M, Cin*k*k) bf16

    acc = jnp.dot(lhs, w_ref[...], preferred_element_type=jnp.float32)   # (M, Cout) f32
    conv = jnp.maximum(acc + b_ref[...], 0.0)

    # Fused torch.cat([x, conv], 1): exact f32 copy of the input tile in the low lanes.
    x_tile = x_ref[pl.ds(p, th), pl.ds(p, wo_pad), :].reshape(m, cin)
    out = jnp.concatenate([x_tile, conv], axis=-1)                  # (M, Cin + Cout)
    o_ref[...] = out.reshape(th, wo_pad, cin + cout).astype(o_ref.dtype)


@functools.partial(jax.jit, static_argnames=("kernel_size", "stride"))
def dense_conv2d(x, weight, bias, *, kernel_size, stride):
    """DenseConv2d forward.

    x:      (N, Cin, H, W) float32 (NCHW, like PyTorch)
    weight: (Cout, Cin, k, k)      torch conv weight layout
    bias:   (Cout,)
    returns (N, Cin + Cout, H, W)  == concat([x, relu(conv(reflect_pad(x)))], channel)
    """
    assert stride == 1, "DenseConv2d channel concat requires stride == 1"
    k = kernel_size
    assert k % 2 == 1, "shape-preserving reflection pad requires an odd kernel size"
    p = k // 2

    n, cin, h, w = x.shape
    cout = weight.shape[0]
    cch = cin + cout
    kkc = k * k * cin

    # ---- tiling --------------------------------------------------------------
    wo_pad = _round_up(w, 8)                               # sublane-aligned row width
    th = min(_round_up(h, 8), max(8, (1024 // wo_pad) // 8 * 8))   # ~512-2048 positions
    ho_pad = _round_up(h, th)
    n_tiles = ho_pad // th
    hp_pad = ho_pad + k - 1
    wp_pad = wo_pad + k - 1

    # ---- host-side prep ------------------------------------------------------
    x_nhwc = jnp.transpose(x, (0, 2, 3, 1)).astype(jnp.float32)           # (N, H, W, Cin)
    xp = jnp.pad(x_nhwc, ((0, 0), (p, p), (p, p), (0, 0)), mode="reflect")
    eh, ew = hp_pad - (h + 2 * p), wp_pad - (w + 2 * p)
    if eh or ew:                                      # zero tail rows/cols, sliced at the end
        xp = jnp.pad(xp, ((0, 0), (0, eh), (0, ew), (0, 0)))

    # Pre-tile into overlapping halo'd row slabs: (N, n_tiles, TH+k-1, Wp_pad, Cin).
    row_idx = jnp.arange(n_tiles)[:, None] * th + jnp.arange(th + k - 1)[None, :]
    x_tiles = xp[:, row_idx]

    # im2col weight slab (k*k*Cin, Cout), rows ordered (kh, kw, ci) to match the LHS concat.
    w_slab = jnp.transpose(weight, (2, 3, 1, 0)).reshape(kkc, cout).astype(jnp.bfloat16)
    b_row = bias.astype(jnp.float32).reshape(1, cout)

    kernel = functools.partial(_dense_conv_kernel, th=th, wo_pad=wo_pad,
                               cin=cin, cout=cout, k=k, p=p)

    # ---- VMEM budget (generation-aware) + advisory cost (real dims) ----------
    lane = 128
    in_block = (th + k - 1) * _round_up(wp_pad, 8) * lane * 4     # cin lane-padded in VMEM
    out_block = th * wo_pad * lane * 4                            # cch lane-padded in VMEM
    temps = 2 * th * wo_pad * lane * 4                            # lhs / acc / conv temporaries
    vmem_need = 2 * (in_block + out_block) + temps + (1 << 20)
    try:
        cap = int(getattr(pltpu.get_tpu_info(), "vmem_capacity_bytes", 64 * 2**20))
    except Exception:  # pragma: no cover - conservative fallback
        cap = 64 * 2**20
    vmem_limit = int(min(int(cap * 0.85), max(32 * 2**20, vmem_need)))

    flops = 2 * n * h * w * cin * k * k * cout
    bytes_accessed = int(4 * x_tiles.size + 2 * w_slab.size + 4 * b_row.size
                         + 4 * n * ho_pad * wo_pad * cch)

    out_pad = pl.pallas_call(
        kernel,
        out_shape=jax.ShapeDtypeStruct((n, ho_pad, wo_pad, cch), jnp.float32),
        grid_spec=pltpu.PrefetchScalarGridSpec(
            num_scalar_prefetch=0,
            grid=(n, n_tiles),
            in_specs=[
                pl.BlockSpec((None, None, th + k - 1, wp_pad, cin),
                             lambda b, i: (b, i, 0, 0, 0)),
                pl.BlockSpec((kkc, cout), lambda b, i: (0, 0)),
                pl.BlockSpec((1, cout), lambda b, i: (0, 0)),
            ],
            out_specs=pl.BlockSpec((None, th, wo_pad, cch), lambda b, i: (b, i, 0, 0)),
        ),
        compiler_params=pltpu.CompilerParams(
            dimension_semantics=("parallel", "parallel"),
            vmem_limit_bytes=vmem_limit),
        cost_estimate=pl.CostEstimate(flops=flops, transcendentals=0,
                                      bytes_accessed=bytes_accessed),
    )(x_tiles, w_slab, b_row)

    # Channels are already [x | relu(conv)]; only the tail slice + NCHW layout remain.
    out = out_pad[:, :h, :w, :]
    return jnp.transpose(out, (0, 3, 1, 2))


def _reference(x, weight, bias, kernel_size, stride):
    p = kernel_size // 2
    xp = jnp.pad(x, ((0, 0), (0, 0), (p, p), (p, p)), mode="reflect")
    y = jax.lax.conv_general_dilated(
        xp, weight, window_strides=(stride, stride), padding="VALID",
        dimension_numbers=("NCHW", "OIHW", "NCHW"))
    y = jnp.maximum(y + bias[None, :, None, None], 0.0)
    return jnp.concatenate([x, y], axis=1)


if __name__ == "__main__":
    key = jax.random.PRNGKey(0)
    kx, kw, kb = jax.random.split(key, 3)

    N, CIN, H, W = 2, 4, 16, 16
    COUT, K, STRIDE = 8, 3, 1

    x = jax.random.normal(kx, (N, CIN, H, W), dtype=jnp.float32)
    weight = 0.1 * jax.random.normal(kw, (COUT, CIN, K, K), dtype=jnp.float32)
    bias = 0.1 * jax.random.normal(kb, (COUT,), dtype=jnp.float32)

    out = dense_conv2d(x, weight, bias, kernel_size=K, stride=STRIDE)
    out = jax.block_until_ready(out)

    ref = _reference(x, weight, bias, K, STRIDE)
    assert out.shape == (N, CIN + COUT, H, W), out.shape
    err = float(jnp.max(jnp.abs(out - ref)))
    # bf16 matmul operands with f32 accumulation -> relaxed tolerance (per review).
    assert jnp.allclose(out, ref, atol=5e-2, rtol=5e-2), err

    print("KERNEL_OK")
</pallas_src>

<mosaic_0001>
module attributes {stable_mosaic.version = 11 : i64} {
  func.func @_dense_conv_kernel(%arg0: i32, %arg1: i32, %arg2: memref<1x1x18x18x4xf32, #tpu.memory_space<vmem>>, %arg3: memref<36x8xbf16, #tpu.memory_space<vmem>>, %arg4: memref<1x8xf32, #tpu.memory_space<vmem>>, %arg5: memref<1x16x16x12xf32, #tpu.memory_space<vmem>>) attributes {dimension_semantics = [#tpu.dimension_semantics<parallel>, #tpu.dimension_semantics<parallel>], iteration_bounds = array<i64: 2, 1>, scalar_prefetch = 0 : i64, scratch_operands = 0 : i64, tpu.core_type = #tpu.core_type<tc>, window_params = [{transform_indices = @transform_0, window_bounds = array<i64: 1, 1, 18, 18, 4>}, {pipeline_mode = #tpu.pipeline_mode<synchronous>, transform_indices = @transform_1, window_bounds = array<i64: 36, 8>}, {pipeline_mode = #tpu.pipeline_mode<synchronous>, transform_indices = @transform_2, window_bounds = array<i64: 1, 8>}, {transform_indices = @transform_3, window_bounds = array<i64: 1, 16, 16, 12>}]} {
    %c0 = arith.constant 0 : index
    %c0_0 = arith.constant 0 : index
    %c0_1 = arith.constant 0 : index
    %c0_2 = arith.constant 0 : index
    %c0_3 = arith.constant 0 : index
    %0 = vector.load %arg2[%c0, %c0_0, %c0_1, %c0_2, %c0_3] : memref<1x1x18x18x4xf32, #tpu.memory_space<vmem>>, vector<1x1x16x16x4xf32>
    %1 = vector.shape_cast %0 : vector<1x1x16x16x4xf32> to vector<16x16x4xf32>
    %2 = vector.shape_cast %1 : vector<16x16x4xf32> to vector<256x4xf32>
    %3 = arith.truncf %2 : vector<256x4xf32> to vector<256x4xbf16>
    %c0_4 = arith.constant 0 : index
    %c0_5 = arith.constant 0 : index
    %c0_6 = arith.constant 0 : index
    %c1 = arith.constant 1 : index
    %c0_7 = arith.constant 0 : index
    %4 = vector.load %arg2[%c0_4, %c0_5, %c0_6, %c1, %c0_7] : memref<1x1x18x18x4xf32, #tpu.memory_space<vmem>>, vector<1x1x16x16x4xf32>
    %5 = vector.shape_cast %4 : vector<1x1x16x16x4xf32> to vector<16x16x4xf32>
    %6 = vector.shape_cast %5 : vector<16x16x4xf32> to vector<256x4xf32>
    %7 = arith.truncf %6 : vector<256x4xf32> to vector<256x4xbf16>
    %c0_8 = arith.constant 0 : index
    %c0_9 = arith.constant 0 : index
    %c0_10 = arith.constant 0 : index
    %c2 = arith.constant 2 : index
    %c0_11 = arith.constant 0 : index
    %8 = vector.load %arg2[%c0_8, %c0_9, %c0_10, %c2, %c0_11] : memref<1x1x18x18x4xf32, #tpu.memory_space<vmem>>, vector<1x1x16x16x4xf32>
    %9 = vector.shape_cast %8 : vector<1x1x16x16x4xf32> to vector<16x16x4xf32>
    %10 = vector.shape_cast %9 : vector<16x16x4xf32> to vector<256x4xf32>
    %11 = arith.truncf %10 : vector<256x4xf32> to vector<256x4xbf16>
    %c0_12 = arith.constant 0 : index
    %c0_13 = arith.constant 0 : index
    %c1_14 = arith.constant 1 : index
    %c0_15 = arith.constant 0 : index
    %c0_16 = arith.constant 0 : index
    %12 = vector.load %arg2[%c0_12, %c0_13, %c1_14, %c0_15, %c0_16] : memref<1x1x18x18x4xf32, #tpu.memory_space<vmem>>, vector<1x1x16x16x4xf32>
    %13 = vector.shape_cast %12 : vector<1x1x16x16x4xf32> to vector<16x16x4xf32>
    %14 = vector.shape_cast %13 : vector<16x16x4xf32> to vector<256x4xf32>
    %15 = arith.truncf %14 : vector<256x4xf32> to vector<256x4xbf16>
    %c0_17 = arith.constant 0 : index
    %c0_18 = arith.constant 0 : index
    %c1_19 = arith.constant 1 : index
    %c1_20 = arith.constant 1 : index
    %c0_21 = arith.constant 0 : index
    %16 = vector.load %arg2[%c0_17, %c0_18, %c1_19, %c1_20, %c0_21] : memref<1x1x18x18x4xf32, #tpu.memory_space<vmem>>, vector<1x1x16x16x4xf32>
    %17 = vector.shape_cast %16 : vector<1x1x16x16x4xf32> to vector<16x16x4xf32>
    %18 = vector.shape_cast %17 : vector<16x16x4xf32> to vector<256x4xf32>
    %19 = arith.truncf %18 : vector<256x4xf32> to vector<256x4xbf16>
    %c0_22 = arith.constant 0 : index
    %c0_23 = arith.constant 0 : index
    %c1_24 = arith.constant 1 : index
    %c2_25 = arith.constant 2 : index
    %c0_26 = arith.constant 0 : index
    %20 = vector.load %arg2[%c0_22, %c0_23, %c1_24, %c2_25, %c0_26] : memref<1x1x18x18x4xf32, #tpu.memory_space<vmem>>, vector<1x1x16x16x4xf32>
    %21 = vector.shape_cast %20 : vector<1x1x16x16x4xf32> to vector<16x16x4xf32>
    %22 = vector.shape_cast %21 : vector<16x16x4xf32> to vector<256x4xf32>
    %23 = arith.truncf %22 : vector<256x4xf32> to vector<256x4xbf16>
    %c0_27 = arith.constant 0 : index
    %c0_28 = arith.constant 0 : index
    %c2_29 = arith.constant 2 : index
    %c0_30 = arith.constant 0 : index
    %c0_31 = arith.constant 0 : index
    %24 = vector.load %arg2[%c0_27, %c0_28, %c2_29, %c0_30, %c0_31] : memref<1x1x18x18x4xf32, #tpu.memory_space<vmem>>, vector<1x1x16x16x4xf32>
    %25 = vector.shape_cast %24 : vector<1x1x16x16x4xf32> to vector<16x16x4xf32>
    %26 = vector.shape_cast %25 : vector<16x16x4xf32> to vector<256x4xf32>
    %27 = arith.truncf %26 : vector<256x4xf32> to vector<256x4xbf16>
    %c0_32 = arith.constant 0 : index
    %c0_33 = arith.constant 0 : index
    %c2_34 = arith.constant 2 : index
    %c1_35 = arith.constant 1 : index
    %c0_36 = arith.constant 0 : index
    %28 = vector.load %arg2[%c0_32, %c0_33, %c2_34, %c1_35, %c0_36] : memref<1x1x18x18x4xf32, #tpu.memory_space<vmem>>, vector<1x1x16x16x4xf32>
    %29 = vector.shape_cast %28 : vector<1x1x16x16x4xf32> to vector<16x16x4xf32>
    %30 = vector.shape_cast %29 : vector<16x16x4xf32> to vector<256x4xf32>
    %31 = arith.truncf %30 : vector<256x4xf32> to vector<256x4xbf16>
    %c0_37 = arith.constant 0 : index
    %c0_38 = arith.constant 0 : index
    %c2_39 = arith.constant 2 : index
    %c2_40 = arith.constant 2 : index
    %c0_41 = arith.constant 0 : index
    %32 = vector.load %arg2[%c0_37, %c0_38, %c2_39, %c2_40, %c0_41] : memref<1x1x18x18x4xf32, #tpu.memory_space<vmem>>, vector<1x1x16x16x4xf32>
    %33 = vector.shape_cast %32 : vector<1x1x16x16x4xf32> to vector<16x16x4xf32>
    %34 = vector.shape_cast %33 : vector<16x16x4xf32> to vector<256x4xf32>
    %35 = arith.truncf %34 : vector<256x4xf32> to vector<256x4xbf16>
    %36 = tpu.concatenate %3, %7, %11, %15, %19, %23, %27, %31, %35 in 1 : vector<256x4xbf16>, vector<256x4xbf16>, vector<256x4xbf16>, vector<256x4xbf16>, vector<256x4xbf16>, vector<256x4xbf16>, vector<256x4xbf16>, vector<256x4xbf16>, vector<256x4xbf16> -> vector<256x36xbf16>
    %c0_42 = arith.constant 0 : index
    %c0_43 = arith.constant 0 : index
    %37 = vector.load %arg3[%c0_42, %c0_43] : memref<36x8xbf16, #tpu.memory_space<vmem>>, vector<36x8xbf16>
    %cst = arith.constant dense<0.000000e+00> : vector<256x8xf32>
    %38 = tpu.matmul %36, %37, %cst {dimension_numbers = #tpu.dot_dimension_numbers<[1], [0], [0], [1], [0, 0, 1, 1], [], []>} : vector<256x36xbf16>, vector<36x8xbf16>, vector<256x8xf32> -> vector<256x8xf32>
    %c0_44 = arith.constant 0 : index
    %c0_45 = arith.constant 0 : index
    %39 = vector.load %arg4[%c0_44, %c0_45] : memref<1x8xf32, #tpu.memory_space<vmem>>, vector<1x8xf32>
    %40 = vector.broadcast %39 : vector<1x8xf32> to vector<256x8xf32>
    %41 = arith.addf %38, %40 : vector<256x8xf32>
    %cst_46 = arith.constant 0.000000e+00 : f32
    %42 = vector.broadcast %cst_46 : f32 to vector<256x8xf32>
    %43 = arith.maximumf %41, %42 : vector<256x8xf32>
    %c0_47 = arith.constant 0 : index
    %c0_48 = arith.constant 0 : index
    %c1_49 = arith.constant 1 : index
    %c1_50 = arith.constant 1 : index
    %c0_51 = arith.constant 0 : index
    %44 = vector.load %arg2[%c0_47, %c0_48, %c1_49, %c1_50, %c0_51] : memref<1x1x18x18x4xf32, #tpu.memory_space<vmem>>, vector<1x1x16x16x4xf32>
    %45 = vector.shape_cast %44 : vector<1x1x16x16x4xf32> to vector<16x16x4xf32>
    %46 = vector.shape_cast %45 : vector<16x16x4xf32> to vector<256x4xf32>
    %47 = tpu.concatenate %46, %43 in 1 : vector<256x4xf32>, vector<256x8xf32> -> vector<256x12xf32>
    %48 = vector.shape_cast %47 : vector<256x12xf32> to vector<16x16x12xf32>
    %c0_52 = arith.constant 0 : index
    %c0_53 = arith.constant 0 : index
    %c0_54 = arith.constant 0 : index
    %c0_55 = arith.constant 0 : index
    %49 = vector.load %arg5[%c0_52, %c0_53, %c0_54, %c0_55] : memref<1x16x16x12xf32, #tpu.memory_space<vmem>>, vector<1x16x16x12xf32>
    %50 = vector.shape_cast %49 : vector<1x16x16x12xf32> to vector<16x16x12xf32>
    %51 = vector.shape_cast %48 : vector<16x16x12xf32> to vector<1x16x16x12xf32>
    tpu.vector_store %arg5[%c0_52, %c0_53, %c0_54, %c0_55], %51 {strides = array<i32>} : memref<1x16x16x12xf32, #tpu.memory_space<vmem>>, vector<1x16x16x12xf32>,
    return
  }
  func.func @transform_0(%arg0: i32, %arg1: i32) -> (i32, i32, i32, i32, i32) {
    %c0_i32 = arith.constant 0 : i32
    %c0_i32_0 = arith.constant 0 : i32
    %c0_i32_1 = arith.constant 0 : i32
    %c0_i32_2 = arith.constant 0 : i32
    return %arg0, %arg1, %c0_i32, %c0_i32_0, %c0_i32_1 : i32, i32, i32, i32, i32
  }
  func.func @transform_1(%arg0: i32, %arg1: i32) -> (i32, i32) {
    %c0_i32 = arith.constant 0 : i32
    %c0_i32_0 = arith.constant 0 : i32
    %c0_i32_1 = arith.constant 0 : i32
    return %c0_i32, %c0_i32_0 : i32, i32
  }
  func.func @transform_2(%arg0: i32, %arg1: i32) -> (i32, i32) {
    %c0_i32 = arith.constant 0 : i32
    %c0_i32_0 = arith.constant 0 : i32
    %c0_i32_1 = arith.constant 0 : i32
    return %c0_i32, %c0_i32_0 : i32, i32
  }
  func.func @transform_3(%arg0: i32, %arg1: i32) -> (i32, i32, i32, i32) {
    %c0_i32 = arith.constant 0 : i32
    %c0_i32_0 = arith.constant 0 : i32
    %c0_i32_1 = arith.constant 0 : i32
    return %arg0, %arg1, %c0_i32, %c0_i32_0 : i32, i32, i32, i32
  }
}

</mosaic_0001>

<llo_original>
// kernel: dense_conv2d.1
$region0: #{dense_conv2d.1}
  #allocation0 [shape = 'u32[]', space=smem, size = 0x4, offset = 0x4, fixed_abs, tag = 'smem constant byte address 0x4 - core index']
  #allocation1 [shape = 'u32[144,128]{1,0:T(1,128)}', space=vmem, size = 0x12000, scoped, tag = 'internal scratch']
  %s0 = inlined_call_operand.vmem [shape: f32[2,1,18,18,4], index: 0, kind: input, shape index: {}]
  %s1 = inlined_call_operand.vmem [shape: bf16[36,8], index: 1, kind: input, shape index: {}]
  %s2 = inlined_call_operand.vmem [shape: f32[1,8], index: 2, kind: input, shape index: {}]
  %s3 = inlined_call_operand.vmem [shape: f32[2,16,16,12], index: 3, kind: output, shape index: {}]
  %s4 = sld [smem:[#allocation0]]
  $region45: #{dense_conv2d.1} parent=0
    _
  %s6 = ssub.s32 1, %s4
  %s7 = scalar_select 0, %s6, %s4
  loop: start=0, step=1, limit=4
  $region2: #{dense_conv2d.1} parent=0 // loop_pre_header
    _
  $region3: #{dense_conv2d.1} parent=0 // loop_header
    %s9 = sphi 0, %s13
    %p10 = scmp.ge.s32.totalorder %s9, 4
    %s16 = sphi 0, %s28
    %s17 = sphi 0, %s24
    %s18 = sphi 0, %s16
    %s19 = sphi 0, %s17
    %s20 = sphi 0, %s18
    %s21 = sphi 0, %s19
    %s33 = sphi 0, %s35
    %s36 = sphi 0, %s33
    %s37 = sphi 0, %s36
    %s53 = sphi 0, %s37
    %s57 = sphi 0, %s57
    %s59 = sphi 0, %s57
    %s60 = sphi 0, %s59
    %s74 = sphi 0, %s60
    %s78 = sphi 0, %s78
    %s80 = sphi 0, %s78
    %s81 = sphi 0, %s80
    %s95 = sphi 0, %s81
    %s103 = sphi 0, %s105
    %s106 = sphi 0, %s103
    %s107 = sphi 0, %s106
    %s123 = sphi 0, %s107
  $region4: #{dense_conv2d.1} parent=0 // loop_header_branch
    %12 = sbr.rel (%p10) target = $region8
  $region5: #{dense_conv2d.1} parent=0 // loop_body
    %s14 = ssub.s32 %s9, 1
    %s15 = ssub.s32 %s9, 2
    %s22 = sadd.s32 1, %s17
    %p23 = scmp.ge.s32.totalorder %s22, 1
    %s24 = scalar_select %p23, 0, %s22
    %s25 = sadd.s32 1, %s16
    %s26 = scalar_select %p23, %s25, %s16
    %p27 = scmp.ge.s32.totalorder %s26, 2
    %s28 = scalar_select %p27, 0, %s26
    %s29 = ssub.s32 %s16, %s28
    %s30 = ssub.s32 %s17, %s24
    %s31 = sor.u32 %s29, %s30
    %p32 = scmp.eq.s32.totalorder %s31, 0
    %s34 = sadd.s32 %s33, 1
    %s35 = scalar_select %p32, %s33, %s34
    %p38 = pneg %p32
    %p39 = scmp.eq.s32.totalorder %s9, 1
    %p40 = por %p38, %p39
    %p41 = scmp.ne.s32.totalorder %s33, %s36
    %p42 = scmp.eq.s32.totalorder %s9, 0
    %p43 = por %p41, %p42
    %p44 = scmp.ne.s32.totalorder %s33, %s36
    %p45 = scmp.eq.s32.totalorder %s14, 1
    %p46 = por %p44, %p45
    %p47 = scmp.ne.s32.totalorder %s36, %s37
    %p48 = scmp.eq.s32.totalorder %s14, 0
    %p49 = por %p47, %p48
    %p50 = scmp.ne.s32.totalorder %s36, %s37
    %p51 = scmp.eq.s32.totalorder %s15, 1
    %p52 = por %p50, %p51
    %p54 = scmp.ne.s32.totalorder %s37, %s53
    %p55 = scmp.eq.s32.totalorder %s15, 0
    %p56 = por %p54, %p55
    %s58 = sadd.s32 %s57, 1
    %p61 = scmp.eq.s32.totalorder %s9, 1
    %p62 = scmp.ne.s32.totalorder %s57, %s59
    %p63 = scmp.eq.s32.totalorder %s9, 0
    %p64 = por %p62, %p63
    %p65 = scmp.ne.s32.totalorder %s57, %s59
    %p66 = scmp.eq.s32.totalorder %s14, 1
    %p67 = por %p65, %p66
    %p68 = scmp.ne.s32.totalorder %s59, %s60
    %p69 = scmp.eq.s32.totalorder %s14, 0
    %p70 = por %p68, %p69
    %p71 = scmp.ne.s32.totalorder %s59, %s60
    %p72 = scmp.eq.s32.totalorder %s15, 1
    %p73 = por %p71, %p72
    %p75 = scmp.ne.s32.totalorder %s60, %s74
    %p76 = scmp.eq.s32.totalorder %s15, 0
    %p77 = por %p75, %p76
    %s79 = sadd.s32 %s78, 1
    %p82 = scmp.eq.s32.totalorder %s9, 1
    %p83 = scmp.ne.s32.totalorder %s78, %s80
    %p84 = scmp.eq.s32.totalorder %s9, 0
    %p85 = por %p83, %p84
    %p86 = scmp.ne.s32.totalorder %s78, %s80
    %p87 = scmp.eq.s32.totalorder %s14, 1
    %p88 = por %p86, %p87
    %p89 = scmp.ne.s32.totalorder %s80, %s81
    %p90 = scmp.eq.s32.totalorder %s14, 0
    %p91 = por %p89, %p90
    %p92 = scmp.ne.s32.totalorder %s80, %s81
    %p93 = scmp.eq.s32.totalorder %s15, 1
    %p94 = por %p92, %p93
    %p96 = scmp.ne.s32.totalorder %s81, %s95
    %p97 = scmp.eq.s32.totalorder %s15, 0
    %p98 = por %p96, %p97
    %s99 = ssub.s32 %s16, %s28
    %s100 = ssub.s32 %s17, %s24
    %s101 = sor.u32 %s99, %s100
    %p102 = scmp.eq.s32.totalorder %s101, 0
    %s104 = sadd.s32 %s103, 1
    %s105 = scalar_select %p102, %s103, %s104
    %p108 = pneg %p102
    %p109 = scmp.eq.s32.totalorder %s9, 1
    %p110 = por %p108, %p109
    %p111 = scmp.ne.s32.totalorder %s103, %s106
    %p112 = scmp.eq.s32.totalorder %s9, 0
    %p113 = por %p111, %p112
    %p114 = scmp.ne.s32.totalorder %s103, %s106
    %p115 = scmp.eq.s32.totalorder %s14, 1
    %p116 = por %p114, %p115
    %p117 = scmp.ne.s32.totalorder %s106, %s107
    %p118 = scmp.eq.s32.totalorder %s14, 0
    %p119 = por %p117, %p118
    %p120 = scmp.ne.s32.totalorder %s106, %s107
    %p121 = scmp.eq.s32.totalorder %s15, 1
    %p122 = por %p120, %p121
    %p124 = scmp.ne.s32.totalorder %s107, %s123
    %p125 = scmp.eq.s32.totalorder %s15, 0
    %p126 = por %p124, %p125
    %p127 = scmp.le.s32.totalorder 1, %s9
    %p128 = scmp.lt.s32.totalorder %s9, 3
    %p129 = pnand %p127, %p128
    %p130 = pneg %p129
    // Predicated region
    $region9: #{dense_conv2d.1} parent=5 // pred_check
      _
    $region10: #{dense_conv2d.1} parent=5 // pred_check_branch
      %132 = sbr.rel (%p129) target = $region12
    $region11: #{dense_conv2d.1} parent=5 // pred_region
      %s133 = ssub.s32 %s9, 1
      // Predicated region
      $region13: #{dense_conv2d.1} parent=11 // pred_check
        %p134 = pneg %p70
      $region14: #{dense_conv2d.1} parent=11 // pred_check_branch
        %136 = sbr.rel (%p134) target = $region16
      $region15: #{dense_conv2d.1} parent=11 // pred_region
        _
      $region16: #{dense_conv2d.1} parent=11 // pred_fallthru
        _
      // Predicated region
      $region17: #{dense_conv2d.1} parent=11 // pred_check
        %p137 = pneg %p91
      $region18: #{dense_conv2d.1} parent=11 // pred_check_branch
        %139 = sbr.rel (%p137) target = $region20
      $region19: #{dense_conv2d.1} parent=11 // pred_region
        _
      $region20: #{dense_conv2d.1} parent=11 // pred_fallthru
        _
    $region12: #{dense_conv2d.1} parent=5 // pred_fallthru
      _
    %p140 = scmp.lt.s32.totalorder %s9, 2
    // Predicated region
    $region21: #{dense_conv2d.1} parent=5 // pred_check
      %p141 = pneg %p140
    $region22: #{dense_conv2d.1} parent=5 // pred_check_branch
      %143 = sbr.rel (%p141) target = $region24
    $region23: #{dense_conv2d.1} parent=5 // pred_region
      // Predicated region
      $region25: #{dense_conv2d.1} parent=23 // pred_check
        %p144 = pneg %p43
      $region26: #{dense_conv2d.1} parent=23 // pred_check_branch
        %146 = sbr.rel (%p144) target = $region28
      $region27: #{dense_conv2d.1} parent=23 // pred_region
        %p147 = scmp.lt.s32.totalorder %s16, 1
        %s148 = scalar_select %p147, %s16, 1
        %p149 = scmp.lt.s32.totalorder %s17, 0
        %s150 = scalar_select %p149, %s17, 0
        %s151 = smul.addr %s150, 54
        %s152 = smul.addr %s148, 54
        %s153 = sadd.s32 %s151, %s152
        %s154 = smul.addr %s153, 8
        %s155 = scalar_lea.vmem %s0, %s154
      $region28: #{dense_conv2d.1} parent=23 // pred_fallthru
        _
    $region24: #{dense_conv2d.1} parent=5 // pred_fallthru
      _
    %p156 = scmp.le.s32.totalorder 1, %s9
    %p157 = scmp.lt.s32.totalorder %s9, 3
    %p158 = pnand %p156, %p157
    %p159 = pneg %p158
    // Predicated region
    $region29: #{dense_conv2d.1} parent=5 // pred_check
      _
    $region30: #{dense_conv2d.1} parent=5 // pred_check_branch
      %161 = sbr.rel (%p158) target = $region32
    $region31: #{dense_conv2d.1} parent=5 // pred_region
      %s162 = ssub.s32 %s9, 1
      %p163 = scmp.lt.s32.totalorder %s18, 1
      %s164 = scalar_select %p163, %s18, 1
      %p165 = scmp.lt.s32.totalorder %s19, 0
      %s166 = scalar_select %p165, %s19, 0
      %s167 = smul.addr %s166, 54
      %s168 = smul.addr %s164, 54
      %s169 = sadd.s32 %s167, %s168
      %s170 = smul.addr %s169, 8
      %s171 = scalar_lea.vmem %s0, %s170
      %p172 = pneg %p49
      %p173 = pneg %p46
      %p174 = pneg %p70
      %p175 = pneg %p67
      %p176 = pneg %p91
      %p177 = pneg %p88
      %p178 = pneg %p119
      %p179 = pneg %p116
      %s180 = smul.u32 16, %s19
      %p181 = scmp.lt.s32.totalorder %s18, 1
      %s182 = scalar_select %p181, %s18, 1
      %p183 = scmp.lt.s32.totalorder %s180, 15
      %s184 = scalar_select %p183, %s180, 15
      %s185 = smul.addr %s184, 2
      %s186 = smul.addr %s182, 32
      %s187 = sadd.s32 %s185, %s186
      %s188 = smul.addr %s187, 8
      %s189 = scalar_lea.vmem %s3, %s188
      %p190 = scmp.lt.s32.totalorder %s18, 1
      %s191 = scalar_select %p190, %s18, 1
      %p192 = scmp.lt.s32.totalorder %s19, 0
      %s193 = scalar_select %p192, %s19, 0
      %s194 = smul.addr %s193, 54
      %s195 = smul.addr %s191, 54
      %s196 = sadd.s32 %s194, %s195
      %s197 = smul.addr %s196, 8
      %s198 = scalar_lea.vmem %s0, %s197
      %s199 = smul.u32 16, %s19
      %p200 = scmp.lt.s32.totalorder %s18, 1
      %s201 = scalar_select %p200, %s18, 1
      %p202 = scmp.lt.s32.totalorder %s199, 15
      %s203 = scalar_select %p202, %s199, 15
      %s204 = smul.addr %s203, 2
      %s205 = smul.addr %s201, 32
      %s206 = sadd.s32 %s204, %s205
      %s207 = smul.addr %s206, 8
      %s208 = scalar_lea.vmem %s3, %s207
      %s209 = smul.u32 16, %s19
      %v211 = vld [vmem:[%s198] sm:$0xff]
      %v212 = vld [vmem:[%s198 + $0x8] sm:$0xff]
      %v213 = vld [vmem:[%s198 + $0x18] sm:$0xff]
      %v214 = vld [vmem:[%s198 + $0x20] sm:$0xff]
      %v215 = vld [vmem:[%s198 + $0x30] sm:$0xff]
      %v216 = vld [vmem:[%s198 + $0x38] sm:$0xff]
      %v217 = vld [vmem:[%s198 + $0x48] sm:$0xff]
      %v218 = vld [vmem:[%s198 + $0x50] sm:$0xff]
      %v219 = vld [vmem:[%s198 + $0x60] sm:$0xff]
      %v220 = vld [vmem:[%s198 + $0x68] sm:$0xff]
      %v221 = vld [vmem:[%s198 + $0x78] sm:$0xff]
      %v222 = vld [vmem:[%s198 + $0x80] sm:$0xff]
      %v223 = vld [vmem:[%s198 + $0x90] sm:$0xff]
      %v224 = vld [vmem:[%s198 + $0x98] sm:$0xff]
      %v225 = vld [vmem:[%s198 + $0xa8] sm:$0xff]
      %v226 = vld [vmem:[%s198 + $0xb0] sm:$0xff]
      %v227 = vld [vmem:[%s198 + $0xc0] sm:$0xff]
      %v228 = vld [vmem:[%s198 + $0xc8] sm:$0xff]
      %v229 = vld [vmem:[%s198 + $0xd8] sm:$0xff]
      %v230 = vld [vmem:[%s198 + $0xe0] sm:$0xff]
      %v231 = vld [vmem:[%s198 + $0xf0] sm:$0xff]
      %v232 = vld [vmem:[%s198 + $0xf8] sm:$0xff]
      %v233 = vld [vmem:[%s198 + $0x108] sm:$0xff]
      %v234 = vld [vmem:[%s198 + $0x110] sm:$0xff]
      %v235 = vld [vmem:[%s198 + $0x120] sm:$0xff]
      %v236 = vld [vmem:[%s198 + $0x128] sm:$0xff]
      %v237 = vld [vmem:[%s198 + $0x138] sm:$0xff]
      %v238 = vld [vmem:[%s198 + $0x140] sm:$0xff]
      %v239 = vld [vmem:[%s198 + $0x150] sm:$0xff]
      %v240 = vld [vmem:[%s198 + $0x158] sm:$0xff]
      %v241 = vld [vmem:[%s198 + $0x168] sm:$0xff]
      %v242 = vld [vmem:[%s198 + $0x170] sm:$0xff]
      %v243 = vpack.c.bf16 %v212, %v211
      %v244 = vpack.c.bf16 %v214, %v213
      %v245 = vpack.c.bf16 %v216, %v215
      %v246 = vpack.c.bf16 %v218, %v217
      %v247 = vpack.c.bf16 %v220, %v219
      %v248 = vpack.c.bf16 %v222, %v221
      %v249 = vpack.c.bf16 %v224, %v223
      %v250 = vpack.c.bf16 %v226, %v225
      %v251 = vpack.c.bf16 %v228, %v227
      %v252 = vpack.c.bf16 %v230, %v229
      %v253 = vpack.c.bf16 %v232, %v231
      %v254 = vpack.c.bf16 %v234, %v233
      %v255 = vpack.c.bf16 %v236, %v235
      %v256 = vpack.c.bf16 %v238, %v237
      %v257 = vpack.c.bf16 %v240, %v239
      %v258 = vpack.c.bf16 %v242, %v241
      %v259 = vld [vmem:[%s198 + $0x1] sm:$0xff]
      %v260 = vld [vmem:[%s198 + $0x9] sm:$0xff]
      %v261 = vld [vmem:[%s198 + $0x19] sm:$0xff]
      %v262 = vld [vmem:[%s198 + $0x21] sm:$0xff]
      %v263 = vld [vmem:[%s198 + $0x31] sm:$0xff]
      %v264 = vld [vmem:[%s198 + $0x39] sm:$0xff]
      %v265 = vld [vmem:[%s198 + $0x49] sm:$0xff]
      %v266 = vld [vmem:[%s198 + $0x51] sm:$0xff]
      %v267 = vld [vmem:[%s198 + $0x61] sm:$0xff]
      %v268 = vld [vmem:[%s198 + $0x69] sm:$0xff]
      %v269 = vld [vmem:[%s198 + $0x79] sm:$0xff]
      %v270 = vld [vmem:[%s198 + $0x81] sm:$0xff]
      %v271 = vld [vmem:[%s198 + $0x91] sm:$0xff]
      %v272 = vld [vmem:[%s198 + $0x99] sm:$0xff]
      %v273 = vld [vmem:[%s198 + $0xa9] sm:$0xff]
      %v274 = vld [vmem:[%s198 + $0xb1] sm:$0xff]
      %v275 = vld [vmem:[%s198 + $0xc1] sm:$0xff]
      %v276 = vld [vmem:[%s198 + $0xc9] sm:$0xff]
      %v277 = vld [vmem:[%s198 + $0xd9] sm:$0xff]
      %v278 = vld [vmem:[%s198 + $0xe1] sm:$0xff]
      %v279 = vld [vmem:[%s198 + $0xf1] sm:$0xff]
      %v280 = vld [vmem:[%s198 + $0xf9] sm:$0xff]
      %v281 = vld [vmem:[%s198 + $0x109] sm:$0xff]
      %v282 = vld [vmem:[%s198 + $0x111] sm:$0xff]
      %v283 = vld [vmem:[%s198 + $0x121] sm:$0xff]
      %v284 = vld [vmem:[%s198 + $0x129] sm:$0xff]
      %v285 = vld [vmem:[%s198 + $0x139] sm:$0xff]
      %v286 = vld [vmem:[%s198 + $0x141] sm:$0xff]
      %v287 = vld [vmem:[%s198 + $0x151] sm:$0xff]
      %v288 = vld [vmem:[%s198 + $0x159] sm:$0xff]
      %v289 = vld [vmem:[%s198 + $0x169] sm:$0xff]
      %v290 = vld [vmem:[%s198 + $0x171] sm:$0xff]
      %v291 = vpack.c.bf16 %v260, %v259
      %v292 = vpack.c.bf16 %v262, %v261
      %v293 = vpack.c.bf16 %v264, %v263
      %v294 = vpack.c.bf16 %v266, %v265
      %v295 = vpack.c.bf16 %v268, %v267
      %v296 = vpack.c.bf16 %v270, %v269
      %v297 = vpack.c.bf16 %v272, %v271
      %v298 = vpack.c.bf16 %v274, %v273
      %v299 = vpack.c.bf16 %v276, %v275
      %v300 = vpack.c.bf16 %v278, %v277
      %v301 = vpack.c.bf16 %v280, %v279
      %v302 = vpack.c.bf16 %v282, %v281
      %v303 = vpack.c.bf16 %v284, %v283
      %v304 = vpack.c.bf16 %v286, %v285
      %v305 = vpack.c.bf16 %v288, %v287
      %v306 = vpack.c.bf16 %v290, %v289
      %v307 = vld [vmem:[%s198 + $0x2] sm:$0xff]
      %v308 = vld [vmem:[%s198 + $0xa] sm:$0xff]
      %v309 = vld [vmem:[%s198 + $0x1a] sm:$0xff]
      %v310 = vld [vmem:[%s198 + $0x22] sm:$0xff]
      %v311 = vld [vmem:[%s198 + $0x32] sm:$0xff]
      %v312 = vld [vmem:[%s198 + $0x3a] sm:$0xff]
      %v313 = vld [vmem:[%s198 + $0x4a] sm:$0xff]
      %v314 = vld [vmem:[%s198 + $0x52] sm:$0xff]
      %v315 = vld [vmem:[%s198 + $0x62] sm:$0xff]
      %v316 = vld [vmem:[%s198 + $0x6a] sm:$0xff]
      %v317 = vld [vmem:[%s198 + $0x7a] sm:$0xff]
      %v318 = vld [vmem:[%s198 + $0x82] sm:$0xff]
      %v319 = vld [vmem:[%s198 + $0x92] sm:$0xff]
      %v320 = vld [vmem:[%s198 + $0x9a] sm:$0xff]
      %v321 = vld [vmem:[%s198 + $0xaa] sm:$0xff]
      %v322 = vld [vmem:[%s198 + $0xb2] sm:$0xff]
      %v323 = vld [vmem:[%s198 + $0xc2] sm:$0xff]
      %v324 = vld [vmem:[%s198 + $0xca] sm:$0xff]
      %v325 = vld [vmem:[%s198 + $0xda] sm:$0xff]
      %v326 = vld [vmem:[%s198 + $0xe2] sm:$0xff]
      %v327 = vld [vmem:[%s198 + $0xf2] sm:$0xff]
      %v328 = vld [vmem:[%s198 + $0xfa] sm:$0xff]
      %v329 = vld [vmem:[%s198 + $0x10a] sm:$0xff]
      %v330 = vld [vmem:[%s198 + $0x112] sm:$0xff]
      %v331 = vld [vmem:[%s198 + $0x122] sm:$0xff]
      %v332 = vld [vmem:[%s198 + $0x12a] sm:$0xff]
      %v333 = vld [vmem:[%s198 + $0x13a] sm:$0xff]
      %v334 = vld [vmem:[%s198 + $0x142] sm:$0xff]
      %v335 = vld [vmem:[%s198 + $0x152] sm:$0xff]
      %v336 = vld [vmem:[%s198 + $0x15a] sm:$0xff]
      %v337 = vld [vmem:[%s198 + $0x16a] sm:$0xff]
      %v338 = vld [vmem:[%s198 + $0x172] sm:$0xff]
      %v339 = vpack.c.bf16 %v308, %v307
      %v340 = vpack.c.bf16 %v310, %v309
      %v341 = vpack.c.bf16 %v312, %v311
      %v342 = vpack.c.bf16 %v314, %v313
      %v343 = vpack.c.bf16 %v316, %v315
      %v344 = vpack.c.bf16 %v318, %v317
      %v345 = vpack.c.bf16 %v320, %v319
      %v346 = vpack.c.bf16 %v322, %v321
      %v347 = vpack.c.bf16 %v324, %v323
      %v348 = vpack.c.bf16 %v326, %v325
      %v349 = vpack.c.bf16 %v328, %v327
      %v350 = vpack.c.bf16 %v330, %v329
      %v351 = vpack.c.bf16 %v332, %v331
      %v352 = vpack.c.bf16 %v334, %v333
      %v353 = vpack.c.bf16 %v336, %v335
      %v354 = vpack.c.bf16 %v338, %v337
      %s355 = scalar_lea.vmem %s198, 24
      %v356 = vld [vmem:[%s355] sm:$0xff]
      %v357 = vld [vmem:[%s355 + $0x8] sm:$0xff]
      %v358 = vld [vmem:[%s355 + $0x18] sm:$0xff]
      %v359 = vld [vmem:[%s355 + $0x20] sm:$0xff]
      %v360 = vld [vmem:[%s355 + $0x30] sm:$0xff]
      %v361 = vld [vmem:[%s355 + $0x38] sm:$0xff]
      %v362 = vld [vmem:[%s355 + $0x48] sm:$0xff]
      %v363 = vld [vmem:[%s355 + $0x50] sm:$0xff]
      %v364 = vld [vmem:[%s355 + $0x60] sm:$0xff]
      %v365 = vld [vmem:[%s355 + $0x68] sm:$0xff]
      %v366 = vld [vmem:[%s355 + $0x78] sm:$0xff]
      %v367 = vld [vmem:[%s355 + $0x80] sm:$0xff]
      %v368 = vld [vmem:[%s355 + $0x90] sm:$0xff]
      %v369 = vld [vmem:[%s355 + $0x98] sm:$0xff]
      %v370 = vld [vmem:[%s355 + $0xa8] sm:$0xff]
      %v371 = vld [vmem:[%s355 + $0xb0] sm:$0xff]
      %v372 = vld [vmem:[%s355 + $0xc0] sm:$0xff]
      %v373 = vld [vmem:[%s355 + $0xc8] sm:$0xff]
      %v374 = vld [vmem:[%s355 + $0xd8] sm:$0xff]
      %v375 = vld [vmem:[%s355 + $0xe0] sm:$0xff]
      %v376 = vld [vmem:[%s355 + $0xf0] sm:$0xff]
      %v377 = vld [vmem:[%s355 + $0xf8] sm:$0xff]
      %v378 = vld [vmem:[%s355 + $0x108] sm:$0xff]
      %v379 = vld [vmem:[%s355 + $0x110] sm:$0xff]
      %v380 = vld [vmem:[%s355 + $0x120] sm:$0xff]
      %v381 = vld [vmem:[%s355 + $0x128] sm:$0xff]
      %v382 = vld [vmem:[%s355 + $0x138] sm:$0xff]
      %v383 = vld [vmem:[%s355 + $0x140] sm:$0xff]
      %v384 = vld [vmem:[%s355 + $0x150] sm:$0xff]
      %v385 = vld [vmem:[%s355 + $0x158] sm:$0xff]
      %v386 = vld [vmem:[%s355 + $0x168] sm:$0xff]
      %v387 = vld [vmem:[%s355 + $0x170] sm:$0xff]
      %v388 = vpack.c.bf16 %v357, %v356
      %v389 = vpack.c.bf16 %v359, %v358
      %v390 = vpack.c.bf16 %v361, %v360
      %v391 = vpack.c.bf16 %v363, %v362
      %v392 = vpack.c.bf16 %v365, %v364
      %v393 = vpack.c.bf16 %v367, %v366
      %v394 = vpack.c.bf16 %v369, %v368
      %v395 = vpack.c.bf16 %v371, %v370
      %v396 = vpack.c.bf16 %v373, %v372
      %v397 = vpack.c.bf16 %v375, %v374
      %v398 = vpack.c.bf16 %v377, %v376
      %v399 = vpack.c.bf16 %v379, %v378
      %v400 = vpack.c.bf16 %v381, %v380
      %v401 = vpack.c.bf16 %v383, %v382
      %v402 = vpack.c.bf16 %v385, %v384
      %v403 = vpack.c.bf16 %v387, %v386
      %v404 = vld [vmem:[%s355 + $0x1] sm:$0xff]
      %v405 = vld [vmem:[%s355 + $0x9] sm:$0xff]
      %v406 = vld [vmem:[%s355 + $0x19] sm:$0xff]
      %v407 = vld [vmem:[%s355 + $0x21] sm:$0xff]
      %v408 = vld [vmem:[%s355 + $0x31] sm:$0xff]
      %v409 = vld [vmem:[%s355 + $0x39] sm:$0xff]
      %v410 = vld [vmem:[%s355 + $0x49] sm:$0xff]
      %v411 = vld [vmem:[%s355 + $0x51] sm:$0xff]
      %v412 = vld [vmem:[%s355 + $0x61] sm:$0xff]
      %v413 = vld [vmem:[%s355 + $0x69] sm:$0xff]
      %v414 = vld [vmem:[%s355 + $0x79] sm:$0xff]
      %v415 = vld [vmem:[%s355 + $0x81] sm:$0xff]
      %v416 = vld [vmem:[%s355 + $0x91] sm:$0xff]
      %v417 = vld [vmem:[%s355 + $0x99] sm:$0xff]
      %v418 = vld [vmem:[%s355 + $0xa9] sm:$0xff]
      %v419 = vld [vmem:[%s355 + $0xb1] sm:$0xff]
      %v420 = vld [vmem:[%s355 + $0xc1] sm:$0xff]
      %v421 = vld [vmem:[%s355 + $0xc9] sm:$0xff]
      %v422 = vld [vmem:[%s355 + $0xd9] sm:$0xff]
      %v423 = vld [vmem:[%s355 + $0xe1] sm:$0xff]
      %v424 = vld [vmem:[%s355 + $0xf1] sm:$0xff]
      %v425 = vld [vmem:[%s355 + $0xf9] sm:$0xff]
      %v426 = vld [vmem:[%s355 + $0x109] sm:$0xff]
      %v427 = vld [vmem:[%s355 + $0x111] sm:$0xff]
      %v428 = vld [vmem:[%s355 + $0x121] sm:$0xff]
      %v429 = vld [vmem:[%s355 + $0x129] sm:$0xff]
      %v430 = vld [vmem:[%s355 + $0x139] sm:$0xff]
      %v431 = vld [vmem:[%s355 + $0x141] sm:$0xff]
      %v432 = vld [vmem:[%s355 + $0x151] sm:$0xff]
      %v433 = vld [vmem:[%s355 + $0x159] sm:$0xff]
      %v434 = vld [vmem:[%s355 + $0x169] sm:$0xff]
      %v435 = vld [vmem:[%s355 + $0x171] sm:$0xff]
      %v436 = vpack.c.bf16 %v405, %v404
      %v437 = vpack.c.bf16 %v407, %v406
      %v438 = vpack.c.bf16 %v409, %v408
      %v439 = vpack.c.bf16 %v411, %v410
      %v440 = vpack.c.bf16 %v413, %v412
      %v441 = vpack.c.bf16 %v415, %v414
      %v442 = vpack.c.bf16 %v417, %v416
      %v443 = vpack.c.bf16 %v419, %v418
      %v444 = vpack.c.bf16 %v421, %v420
      %v445 = vpack.c.bf16 %v423, %v422
      %v446 = vpack.c.bf16 %v425, %v424
      %v447 = vpack.c.bf16 %v427, %v426
      %v448 = vpack.c.bf16 %v429, %v428
      %v449 = vpack.c.bf16 %v431, %v430
      %v450 = vpack.c.bf16 %v433, %v432
      %v451 = vpack.c.bf16 %v435, %v434
      %v452 = vld [vmem:[%s355 + $0x2] sm:$0xff]
      %v453 = vld [vmem:[%s355 + $0xa] sm:$0xff]
      %v454 = vld [vmem:[%s355 + $0x1a] sm:$0xff]
      %v455 = vld [vmem:[%s355 + $0x22] sm:$0xff]
      %v456 = vld [vmem:[%s355 + $0x32] sm:$0xff]
      %v457 = vld [vmem:[%s355 + $0x3a] sm:$0xff]
      %v458 = vld [vmem:[%s355 + $0x4a] sm:$0xff]
      %v459 = vld [vmem:[%s355 + $0x52] sm:$0xff]
      %v460 = vld [vmem:[%s355 + $0x62] sm:$0xff]
      %v461 = vld [vmem:[%s355 + $0x6a] sm:$0xff]
      %v462 = vld [vmem:[%s355 + $0x7a] sm:$0xff]
      %v463 = vld [vmem:[%s355 + $0x82] sm:$0xff]
      %v464 = vld [vmem:[%s355 + $0x92] sm:$0xff]
      %v465 = vld [vmem:[%s355 + $0x9a] sm:$0xff]
      %v466 = vld [vmem:[%s355 + $0xaa] sm:$0xff]
      %v467 = vld [vmem:[%s355 + $0xb2] sm:$0xff]
      %v468 = vld [vmem:[%s355 + $0xc2] sm:$0xff]
      %v469 = vld [vmem:[%s355 + $0xca] sm:$0xff]
      %v470 = vld [vmem:[%s355 + $0xda] sm:$0xff]
      %v471 = vld [vmem:[%s355 + $0xe2] sm:$0xff]
      %v472 = vld [vmem:[%s355 + $0xf2] sm:$0xff]
      %v473 = vld [vmem:[%s355 + $0xfa] sm:$0xff]
      %v474 = vld [vmem:[%s355 + $0x10a] sm:$0xff]
      %v475 = vld [vmem:[%s355 + $0x112] sm:$0xff]
      %v476 = vld [vmem:[%s355 + $0x122] sm:$0xff]
      %v477 = vld [vmem:[%s355 + $0x12a] sm:$0xff]
      %v478 = vld [vmem:[%s355 + $0x13a] sm:$0xff]
      %v479 = vld [vmem:[%s355 + $0x142] sm:$0xff]
      %v480 = vld [vmem:[%s355 + $0x152] sm:$0xff]
      %v481 = vld [vmem:[%s355 + $0x15a] sm:$0xff]
      %v482 = vld [vmem:[%s355 + $0x16a] sm:$0xff]
      %v483 = vld [vmem:[%s355 + $0x172] sm:$0xff]
      %v484 = vpack.c.bf16 %v453, %v452
      %v485 = vpack.c.bf16 %v455, %v454
      %v486 = vpack.c.bf16 %v457, %v456
      %v487 = vpack.c.bf16 %v459, %v458
      %v488 = vpack.c.bf16 %v461, %v460
      %v489 = vpack.c.bf16 %v463, %v462
      %v490 = vpack.c.bf16 %v465, %v464
      %v491 = vpack.c.bf16 %v467, %v466
      %v492 = vpack.c.bf16 %v469, %v468
      %v493 = vpack.c.bf16 %v471, %v470
      %v494 = vpack.c.bf16 %v473, %v472
      %v495 = vpack.c.bf16 %v475, %v474
      %v496 = vpack.c.bf16 %v477, %v476
      %v497 = vpack.c.bf16 %v479, %v478
      %v498 = vpack.c.bf16 %v481, %v480
      %v499 = vpack.c.bf16 %v483, %v482
      %s500 = scalar_lea.vmem %s198, 48
      %v501 = vld [vmem:[%s500] sm:$0xff]
      %v502 = vld [vmem:[%s500 + $0x8] sm:$0xff]
      %v503 = vld [vmem:[%s500 + $0x18] sm:$0xff]
      %v504 = vld [vmem:[%s500 + $0x20] sm:$0xff]
      %v505 = vld [vmem:[%s500 + $0x30] sm:$0xff]
      %v506 = vld [vmem:[%s500 + $0x38] sm:$0xff]
      %v507 = vld [vmem:[%s500 + $0x48] sm:$0xff]
      %v508 = vld [vmem:[%s500 + $0x50] sm:$0xff]
      %v509 = vld [vmem:[%s500 + $0x60] sm:$0xff]
      %v510 = vld [vmem:[%s500 + $0x68] sm:$0xff]
      %v511 = vld [vmem:[%s500 + $0x78] sm:$0xff]
      %v512 = vld [vmem:[%s500 + $0x80] sm:$0xff]
      %v513 = vld [vmem:[%s500 + $0x90] sm:$0xff]
      %v514 = vld [vmem:[%s500 + $0x98] sm:$0xff]
      %v515 = vld [vmem:[%s500 + $0xa8] sm:$0xff]
      %v516 = vld [vmem:[%s500 + $0xb0] sm:$0xff]
      %v517 = vld [vmem:[%s500 + $0xc0] sm:$0xff]
      %v518 = vld [vmem:[%s500 + $0xc8] sm:$0xff]
      %v519 = vld [vmem:[%s500 + $0xd8] sm:$0xff]
      %v520 = vld [vmem:[%s500 + $0xe0] sm:$0xff]
      %v521 = vld [vmem:[%s500 + $0xf0] sm:$0xff]
      %v522 = vld [vmem:[%s500 + $0xf8] sm:$0xff]
      %v523 = vld [vmem:[%s500 + $0x108] sm:$0xff]
      %v524 = vld [vmem:[%s500 + $0x110] sm:$0xff]
      %v525 = vld [vmem:[%s500 + $0x120] sm:$0xff]
      %v526 = vld [vmem:[%s500 + $0x128] sm:$0xff]
      %v527 = vld [vmem:[%s500 + $0x138] sm:$0xff]
      %v528 = vld [vmem:[%s500 + $0x140] sm:$0xff]
      %v529 = vld [vmem:[%s500 + $0x150] sm:$0xff]
      %v530 = vld [vmem:[%s500 + $0x158] sm:$0xff]
      %v531 = vld [vmem:[%s500 + $0x168] sm:$0xff]
      %v532 = vld [vmem:[%s500 + $0x170] sm:$0xff]
      %v533 = vpack.c.bf16 %v502, %v501
      %v534 = vpack.c.bf16 %v504, %v503
      %v535 = vpack.c.bf16 %v506, %v505
      %v536 = vpack.c.bf16 %v508, %v507
      %v537 = vpack.c.bf16 %v510, %v509
      %v538 = vpack.c.bf16 %v512, %v511
      %v539 = vpack.c.bf16 %v514, %v513
      %v540 = vpack.c.bf16 %v516, %v515
      %v541 = vpack.c.bf16 %v518, %v517
      %v542 = vpack.c.bf16 %v520, %v519
      %v543 = vpack.c.bf16 %v522, %v521
      %v544 = vpack.c.bf16 %v524, %v523
      %v545 = vpack.c.bf16 %v526, %v525
      %v546 = vpack.c.bf16 %v528, %v527
      %v547 = vpack.c.bf16 %v530, %v529
      %v548 = vpack.c.bf16 %v532, %v531
      %v549 = vld [vmem:[%s500 + $0x1] sm:$0xff]
      %v550 = vld [vmem:[%s500 + $0x9] sm:$0xff]
      %v551 = vld [vmem:[%s500 + $0x19] sm:$0xff]
      %v552 = vld [vmem:[%s500 + $0x21] sm:$0xff]
      %v553 = vld [vmem:[%s500 + $0x31] sm:$0xff]
      %v554 = vld [vmem:[%s500 + $0x39] sm:$0xff]
      %v555 = vld [vmem:[%s500 + $0x49] sm:$0xff]
      %v556 = vld [vmem:[%s500 + $0x51] sm:$0xff]
      %v557 = vld [vmem:[%s500 + $0x61] sm:$0xff]
      %v558 = vld [vmem:[%s500 + $0x69] sm:$0xff]
      %v559 = vld [vmem:[%s500 + $0x79] sm:$0xff]
      %v560 = vld [vmem:[%s500 + $0x81] sm:$0xff]
      %v561 = vld [vmem:[%s500 + $0x91] sm:$0xff]
      %v562 = vld [vmem:[%s500 + $0x99] sm:$0xff]
      %v563 = vld [vmem:[%s500 + $0xa9] sm:$0xff]
      %v564 = vld [vmem:[%s500 + $0xb1] sm:$0xff]
      %v565 = vld [vmem:[%s500 + $0xc1] sm:$0xff]
      %v566 = vld [vmem:[%s500 + $0xc9] sm:$0xff]
      %v567 = vld [vmem:[%s500 + $0xd9] sm:$0xff]
      %v568 = vld [vmem:[%s500 + $0xe1] sm:$0xff]
      %v569 = vld [vmem:[%s500 + $0xf1] sm:$0xff]
      %v570 = vld [vmem:[%s500 + $0xf9] sm:$0xff]
      %v571 = vld [vmem:[%s500 + $0x109] sm:$0xff]
      %v572 = vld [vmem:[%s500 + $0x111] sm:$0xff]
      %v573 = vld [vmem:[%s500 + $0x121] sm:$0xff]
      %v574 = vld [vmem:[%s500 + $0x129] sm:$0xff]
      %v575 = vld [vmem:[%s500 + $0x139] sm:$0xff]
      %v576 = vld [vmem:[%s500 + $0x141] sm:$0xff]
      %v577 = vld [vmem:[%s500 + $0x151] sm:$0xff]
      %v578 = vld [vmem:[%s500 + $0x159] sm:$0xff]
      %v579 = vld [vmem:[%s500 + $0x169] sm:$0xff]
      %v580 = vld [vmem:[%s500 + $0x171] sm:$0xff]
      %v581 = vpack.c.bf16 %v550, %v549
      %v582 = vpack.c.bf16 %v552, %v551
      %v583 = vpack.c.bf16 %v554, %v553
      %v584 = vpack.c.bf16 %v556, %v555
      %v585 = vpack.c.bf16 %v558, %v557
      %v586 = vpack.c.bf16 %v560, %v559
      %v587 = vpack.c.bf16 %v562, %v561
      %v588 = vpack.c.bf16 %v564, %v563
      %v589 = vpack.c.bf16 %v566, %v565
      %v590 = vpack.c.bf16 %v568, %v567
      %v591 = vpack.c.bf16 %v570, %v569
      %v592 = vpack.c.bf16 %v572, %v571
      %v593 = vpack.c.bf16 %v574, %v573
      %v594 = vpack.c.bf16 %v576, %v575
      %v595 = vpack.c.bf16 %v578, %v577
      %v596 = vpack.c.bf16 %v580, %v579
      %v597 = vld [vmem:[%s500 + $0x2] sm:$0xff]
      %v598 = vld [vmem:[%s500 + $0xa] sm:$0xff]
      %v599 = vld [vmem:[%s500 + $0x1a] sm:$0xff]
      %v600 = vld [vmem:[%s500 + $0x22] sm:$0xff]
      %v601 = vld [vmem:[%s500 + $0x32] sm:$0xff]
      %v602 = vld [vmem:[%s500 + $0x3a] sm:$0xff]
      %v603 = vld [vmem:[%s500 + $0x4a] sm:$0xff]
      %v604 = vld [vmem:[%s500 + $0x52] sm:$0xff]
      %v605 = vld [vmem:[%s500 + $0x62] sm:$0xff]
      %v606 = vld [vmem:[%s500 + $0x6a] sm:$0xff]
      %v607 = vld [vmem:[%s500 + $0x7a] sm:$0xff]
      %v608 = vld [vmem:[%s500 + $0x82] sm:$0xff]
      %v609 = vld [vmem:[%s500 + $0x92] sm:$0xff]
      %v610 = vld [vmem:[%s500 + $0x9a] sm:$0xff]
      %v611 = vld [vmem:[%s500 + $0xaa] sm:$0xff]
      %v612 = vld [vmem:[%s500 + $0xb2] sm:$0xff]
      %v613 = vld [vmem:[%s500 + $0xc2] sm:$0xff]
      %v614 = vld [vmem:[%s500 + $0xca] sm:$0xff]
      %v615 = vld [vmem:[%s500 + $0xda] sm:$0xff]
      %v616 = vld [vmem:[%s500 + $0xe2] sm:$0xff]
      %v617 = vld [vmem:[%s500 + $0xf2] sm:$0xff]
      %v618 = vld [vmem:[%s500 + $0xfa] sm:$0xff]
      %v619 = vld [vmem:[%s500 + $0x10a] sm:$0xff]
      %v620 = vld [vmem:[%s500 + $0x112] sm:$0xff]
      %v621 = vld [vmem:[%s500 + $0x122] sm:$0xff]
      %v622 = vld [vmem:[%s500 + $0x12a] sm:$0xff]
      %v623 = vld [vmem:[%s500 + $0x13a] sm:$0xff]
      %v624 = vld [vmem:[%s500 + $0x142] sm:$0xff]
      %v625 = vld [vmem:[%s500 + $0x152] sm:$0xff]
      %v626 = vld [vmem:[%s500 + $0x15a] sm:$0xff]
      %v627 = vld [vmem:[%s500 + $0x16a] sm:$0xff]
      %v628 = vld [vmem:[%s500 + $0x172] sm:$0xff]
      %v629 = vpack.c.bf16 %v598, %v597
      %v630 = vpack.c.bf16 %v600, %v599
      %v631 = vpack.c.bf16 %v602, %v601
      %v632 = vpack.c.bf16 %v604, %v603
      %v633 = vpack.c.bf16 %v606, %v605
      %v634 = vpack.c.bf16 %v608, %v607
      %v635 = vpack.c.bf16 %v610, %v609
      %v636 = vpack.c.bf16 %v612, %v611
      %v637 = vpack.c.bf16 %v614, %v613
      %v638 = vpack.c.bf16 %v616, %v615
      %v639 = vpack.c.bf16 %v618, %v617
      %v640 = vpack.c.bf16 %v620, %v619
      %v641 = vpack.c.bf16 %v622, %v621
      %v642 = vpack.c.bf16 %v624, %v623
      %v643 = vpack.c.bf16 %v626, %v625
      %v644 = vpack.c.bf16 %v628, %v627
      %661 = vrot.lane.b32.xlu0 %v291, 4
      %v662 = vpop.permute.xlu0 %661
      %663 = vrot.lane.b32.xlu0 %v292, 4
      %v664 = vpop.permute.xlu0 %663
      %665 = vrot.lane.b32.xlu0 %v293, 4
      %v666 = vpop.permute.xlu0 %665
      %667 = vrot.lane.b32.xlu0 %v294, 4
      %v668 = vpop.permute.xlu0 %667
      %669 = vrot.lane.b32.xlu0 %v295, 4
      %v670 = vpop.permute.xlu0 %669
      %671 = vrot.lane.b32.xlu0 %v296, 4
      %v672 = vpop.permute.xlu0 %671
      %673 = vrot.lane.b32.xlu0 %v297, 4
      %v674 = vpop.permute.xlu0 %673
      %675 = vrot.lane.b32.xlu0 %v298, 4
      %v676 = vpop.permute.xlu0 %675
      %677 = vrot.lane.b32.xlu0 %v299, 4
      %v678 = vpop.permute.xlu0 %677
      %679 = vrot.lane.b32.xlu0 %v300, 4
      %v680 = vpop.permute.xlu0 %679
      %681 = vrot.lane.b32.xlu0 %v301, 4
      %v682 = vpop.permute.xlu0 %681
      %683 = vrot.lane.b32.xlu0 %v302, 4
      %v684 = vpop.permute.xlu0 %683
      %685 = vrot.lane.b32.xlu0 %v303, 4
      %v686 = vpop.permute.xlu0 %685
      %687 = vrot.lane.b32.xlu0 %v304, 4
      %v688 = vpop.permute.xlu0 %687
      %689 = vrot.lane.b32.xlu0 %v305, 4
      %v690 = vpop.permute.xlu0 %689
      %691 = vrot.lane.b32.xlu0 %v306, 4
      %v692 = vpop.permute.xlu0 %691
      %709 = vrot.lane.b32.xlu0 %v339, 8
      %v710 = vpop.permute.xlu0 %709
      %711 = vrot.lane.b32.xlu0 %v340, 8
      %v712 = vpop.permute.xlu0 %711
      %713 = vrot.lane.b32.xlu0 %v341, 8
      %v714 = vpop.permute.xlu0 %713
      %715 = vrot.lane.b32.xlu0 %v342, 8
      %v716 = vpop.permute.xlu0 %715
      %717 = vrot.lane.b32.xlu0 %v343, 8
      %v718 = vpop.permute.xlu0 %717
      %719 = vrot.lane.b32.xlu0 %v344, 8
      %v720 = vpop.permute.xlu0 %719
      %721 = vrot.lane.b32.xlu0 %v345, 8
      %v722 = vpop.permute.xlu0 %721
      %723 = vrot.lane.b32.xlu0 %v346, 8
      %v724 = vpop.permute.xlu0 %723
      %725 = vrot.lane.b32.xlu0 %v347, 8
      %v726 = vpop.permute.xlu0 %725
      %727 = vrot.lane.b32.xlu0 %v348, 8
      %v728 = vpop.permute.xlu0 %727
      %729 = vrot.lane.b32.xlu0 %v349, 8
      %v730 = vpop.permute.xlu0 %729
      %731 = vrot.lane.b32.xlu0 %v350, 8
      %v732 = vpop.permute.xlu0 %731
      %733 = vrot.lane.b32.xlu0 %v351, 8
      %v734 = vpop.permute.xlu0 %733
      %735 = vrot.lane.b32.xlu0 %v352, 8
      %v736 = vpop.permute.xlu0 %735
      %737 = vrot.lane.b32.xlu0 %v353, 8
      %v738 = vpop.permute.xlu0 %737
      %739 = vrot.lane.b32.xlu0 %v354, 8
      %v740 = vpop.permute.xlu0 %739
      %757 = vrot.lane.b32.xlu0 %v388, 12
      %v758 = vpop.permute.xlu0 %757
      %759 = vrot.lane.b32.xlu0 %v389, 12
      %v760 = vpop.permute.xlu0 %759
      %761 = vrot.lane.b32.xlu0 %v390, 12
      %v762 = vpop.permute.xlu0 %761
      %763 = vrot.lane.b32.xlu0 %v391, 12
      %v764 = vpop.permute.xlu0 %763
      %765 = vrot.lane.b32.xlu0 %v392, 12
      %v766 = vpop.permute.xlu0 %765
      %767 = vrot.lane.b32.xlu0 %v393, 12
      %v768 = vpop.permute.xlu0 %767
      %769 = vrot.lane.b32.xlu0 %v394, 12
      %v770 = vpop.permute.xlu0 %769
      %771 = vrot.lane.b32.xlu0 %v395, 12
      %v772 = vpop.permute.xlu0 %771
      %773 = vrot.lane.b32.xlu0 %v396, 12
      %v774 = vpop.permute.xlu0 %773
      %775 = vrot.lane.b32.xlu0 %v397, 12
      %v776 = vpop.permute.xlu0 %775
      %777 = vrot.lane.b32.xlu0 %v398, 12
      %v778 = vpop.permute.xlu0 %777
      %779 = vrot.lane.b32.xlu0 %v399, 12
      %v780 = vpop.permute.xlu0 %779
      %781 = vrot.lane.b32.xlu0 %v400, 12
      %v782 = vpop.permute.xlu0 %781
      %783 = vrot.lane.b32.xlu0 %v401, 12
      %v784 = vpop.permute.xlu0 %783
      %785 = vrot.lane.b32.xlu0 %v402, 12
      %v786 = vpop.permute.xlu0 %785
      %787 = vrot.lane.b32.xlu0 %v403, 12
      %v788 = vpop.permute.xlu0 %787
      %805 = vrot.lane.b32.xlu0 %v436, 16
      %v806 = vpop.permute.xlu0 %805
      %807 = vrot.lane.b32.xlu0 %v437, 16
      %v808 = vpop.permute.xlu0 %807
      %809 = vrot.lane.b32.xlu0 %v438, 16
      %v810 = vpop.permute.xlu0 %809
      %811 = vrot.lane.b32.xlu0 %v439, 16
      %v812 = vpop.permute.xlu0 %811
      %813 = vrot.lane.b32.xlu0 %v440, 16
      %v814 = vpop.permute.xlu0 %813
      %815 = vrot.lane.b32.xlu0 %v441, 16
      %v816 = vpop.permute.xlu0 %815
      %817 = vrot.lane.b32.xlu0 %v442, 16
      %v818 = vpop.permute.xlu0 %817
      %819 = vrot.lane.b32.xlu0 %v443, 16
      %v820 = vpop.permute.xlu0 %819
      %821 = vrot.lane.b32.xlu0 %v444, 16
      %v822 = vpop.permute.xlu0 %821
      %823 = vrot.lane.b32.xlu0 %v445, 16
      %v824 = vpop.permute.xlu0 %823
      %825 = vrot.lane.b32.xlu0 %v446, 16
      %v826 = vpop.permute.xlu0 %825
      %827 = vrot.lane.b32.xlu0 %v447, 16
      %v828 = vpop.permute.xlu0 %827
      %829 = vrot.lane.b32.xlu0 %v448, 16
      %v830 = vpop.permute.xlu0 %829
      %831 = vrot.lane.b32.xlu0 %v449, 16
      %v832 = vpop.permute.xlu0 %831
      %833 = vrot.lane.b32.xlu0 %v450, 16
      %v834 = vpop.permute.xlu0 %833
      %835 = vrot.lane.b32.xlu0 %v451, 16
      %v836 = vpop.permute.xlu0 %835
      %853 = vrot.lane.b32.xlu0 %v484, 20
      %v854 = vpop.permute.xlu0 %853
      %855 = vrot.lane.b32.xlu0 %v485, 20
      %v856 = vpop.permute.xlu0 %855
      %857 = vrot.lane.b32.xlu0 %v486, 20
      %v858 = vpop.permute.xlu0 %857
      %859 = vrot.lane.b32.xlu0 %v487, 20
      %v860 = vpop.permute.xlu0 %859
      %861 = vrot.lane.b32.xlu0 %v488, 20
      %v862 = vpop.permute.xlu0 %861
      %863 = vrot.lane.b32.xlu0 %v489, 20
      %v864 = vpop.permute.xlu0 %863
      %865 = vrot.lane.b32.xlu0 %v490, 20
      %v866 = vpop.permute.xlu0 %865
      %867 = vrot.lane.b32.xlu0 %v491, 20
      %v868 = vpop.permute.xlu0 %867
      %869 = vrot.lane.b32.xlu0 %v492, 20
      %v870 = vpop.permute.xlu0 %869
      %871 = vrot.lane.b32.xlu0 %v493, 20
      %v872 = vpop.permute.xlu0 %871
      %873 = vrot.lane.b32.xlu0 %v494, 20
      %v874 = vpop.permute.xlu0 %873
      %875 = vrot.lane.b32.xlu0 %v495, 20
      %v876 = vpop.permute.xlu0 %875
      %877 = vrot.lane.b32.xlu0 %v496, 20
      %v878 = vpop.permute.xlu0 %877
      %879 = vrot.lane.b32.xlu0 %v497, 20
      %v880 = vpop.permute.xlu0 %879
      %881 = vrot.lane.b32.xlu0 %v498, 20
      %v882 = vpop.permute.xlu0 %881
      %883 = vrot.lane.b32.xlu0 %v499, 20
      %v884 = vpop.permute.xlu0 %883
      %901 = vrot.lane.b32.xlu0 %v533, 24
      %v902 = vpop.permute.xlu0 %901
      %903 = vrot.lane.b32.xlu0 %v534, 24
      %v904 = vpop.permute.xlu0 %903
      %905 = vrot.lane.b32.xlu0 %v535, 24
      %v906 = vpop.permute.xlu0 %905
      %907 = vrot.lane.b32.xlu0 %v536, 24
      %v908 = vpop.permute.xlu0 %907
      %909 = vrot.lane.b32.xlu0 %v537, 24
      %v910 = vpop.permute.xlu0 %909
      %911 = vrot.lane.b32.xlu0 %v538, 24
      %v912 = vpop.permute.xlu0 %911
      %913 = vrot.lane.b32.xlu0 %v539, 24
      %v914 = vpop.permute.xlu0 %913
      %915 = vrot.lane.b32.xlu0 %v540, 24
      %v916 = vpop.permute.xlu0 %915
      %917 = vrot.lane.b32.xlu0 %v541, 24
      %v918 = vpop.permute.xlu0 %917
      %919 = vrot.lane.b32.xlu0 %v542, 24
      %v920 = vpop.permute.xlu0 %919
      %921 = vrot.lane.b32.xlu0 %v543, 24
      %v922 = vpop.permute.xlu0 %921
      %923 = vrot.lane.b32.xlu0 %v544, 24
      %v924 = vpop.permute.xlu0 %923
      %925 = vrot.lane.b32.xlu0 %v545, 24
      %v926 = vpop.permute.xlu0 %925
      %927 = vrot.lane.b32.xlu0 %v546, 24
      %v928 = vpop.permute.xlu0 %927
      %929 = vrot.lane.b32.xlu0 %v547, 24
      %v930 = vpop.permute.xlu0 %929
      %931 = vrot.lane.b32.xlu0 %v548, 24
      %v932 = vpop.permute.xlu0 %931
      %949 = vrot.lane.b32.xlu0 %v581, 28
      %v950 = vpop.permute.xlu0 %949
      %951 = vrot.lane.b32.xlu0 %v582, 28
      %v952 = vpop.permute.xlu0 %951
      %953 = vrot.lane.b32.xlu0 %v583, 28
      %v954 = vpop.permute.xlu0 %953
      %955 = vrot.lane.b32.xlu0 %v584, 28
      %v956 = vpop.permute.xlu0 %955
      %957 = vrot.lane.b32.xlu0 %v585, 28
      %v958 = vpop.permute.xlu0 %957
      %959 = vrot.lane.b32.xlu0 %v586, 28
      %v960 = vpop.permute.xlu0 %959
      %961 = vrot.lane.b32.xlu0 %v587, 28
      %v962 = vpop.permute.xlu0 %961
      %963 = vrot.lane.b32.xlu0 %v588, 28
      %v964 = vpop.permute.xlu0 %963
      %965 = vrot.lane.b32.xlu0 %v589, 28
      %v966 = vpop.permute.xlu0 %965
      %967 = vrot.lane.b32.xlu0 %v590, 28
      %v968 = vpop.permute.xlu0 %967
      %969 = vrot.lane.b32.xlu0 %v591, 28
      %v970 = vpop.permute.xlu0 %969
      %971 = vrot.lane.b32.xlu0 %v592, 28
      %v972 = vpop.permute.xlu0 %971
      %973 = vrot.lane.b32.xlu0 %v593, 28
      %v974 = vpop.permute.xlu0 %973
      %975 = vrot.lane.b32.xlu0 %v594, 28
      %v976 = vpop.permute.xlu0 %975
      %977 = vrot.lane.b32.xlu0 %v595, 28
      %v978 = vpop.permute.xlu0 %977
      %979 = vrot.lane.b32.xlu0 %v596, 28
      %v980 = vpop.permute.xlu0 %979
      %997 = vrot.lane.b32.xlu0 %v629, 32
      %v998 = vpop.permute.xlu0 %997
      %999 = vrot.lane.b32.xlu0 %v630, 32
      %v1000 = vpop.permute.xlu0 %999
      %1001 = vrot.lane.b32.xlu0 %v631, 32
      %v1002 = vpop.permute.xlu0 %1001
      %1003 = vrot.lane.b32.xlu0 %v632, 32
      %v1004 = vpop.permute.xlu0 %1003
      %1005 = vrot.lane.b32.xlu0 %v633, 32
      %v1006 = vpop.permute.xlu0 %1005
      %1007 = vrot.lane.b32.xlu0 %v634, 32
      %v1008 = vpop.permute.xlu0 %1007
      %1009 = vrot.lane.b32.xlu0 %v635, 32
      %v1010 = vpop.permute.xlu0 %1009
      %1011 = vrot.lane.b32.xlu0 %v636, 32
      %v1012 = vpop.permute.xlu0 %1011
      %1013 = vrot.lane.b32.xlu0 %v637, 32
      %v1014 = vpop.permute.xlu0 %1013
      %1015 = vrot.lane.b32.xlu0 %v638, 32
      %v1016 = vpop.permute.xlu0 %1015
      %1017 = vrot.lane.b32.xlu0 %v639, 32
      %v1018 = vpop.permute.xlu0 %1017
      %1019 = vrot.lane.b32.xlu0 %v640, 32
      %v1020 = vpop.permute.xlu0 %1019
      %1021 = vrot.lane.b32.xlu0 %v641, 32
      %v1022 = vpop.permute.xlu0 %1021
      %1023 = vrot.lane.b32.xlu0 %v642, 32
      %v1024 = vpop.permute.xlu0 %1023
      %1025 = vrot.lane.b32.xlu0 %v643, 32
      %v1026 = vpop.permute.xlu0 %1025
      %1027 = vrot.lane.b32.xlu0 %v644, 32
      %v1028 = vpop.permute.xlu0 %1027
      %vm1029 = vcmask 31744
      %v1032 = vsel %vm1029, %v243, %v662
      %v1035 = vsel %vm1029, %v244, %v664
      %v1038 = vsel %vm1029, %v245, %v666
      %v1041 = vsel %vm1029, %v246, %v668
      %v1044 = vsel %vm1029, %v247, %v670
      %v1047 = vsel %vm1029, %v248, %v672
      %v1050 = vsel %vm1029, %v249, %v674
      %v1053 = vsel %vm1029, %v250, %v676
      %v1056 = vsel %vm1029, %v251, %v678
      %v1059 = vsel %vm1029, %v252, %v680
      %v1062 = vsel %vm1029, %v253, %v682
      %v1065 = vsel %vm1029, %v254, %v684
      %v1068 = vsel %vm1029, %v255, %v686
      %v1071 = vsel %vm1029, %v256, %v688
      %v1074 = vsel %vm1029, %v257, %v690
      %v1077 = vsel %vm1029, %v258, %v692
      %vm1078 = vcmask 64512
      %v1080 = vsel %vm1078, %v1032, %v710
      %v1082 = vsel %vm1078, %v1035, %v712
      %v1084 = vsel %vm1078, %v1038, %v714
      %v1086 = vsel %vm1078, %v1041, %v716
      %v1088 = vsel %vm1078, %v1044, %v718
      %v1090 = vsel %vm1078, %v1047, %v720
      %v1092 = vsel %vm1078, %v1050, %v722
      %v1094 = vsel %vm1078, %v1053, %v724
      %v1096 = vsel %vm1078, %v1056, %v726
      %v1098 = vsel %vm1078, %v1059, %v728
      %v1100 = vsel %vm1078, %v1062, %v730
      %v1102 = vsel %vm1078, %v1065, %v732
      %v1104 = vsel %vm1078, %v1068, %v734
      %v1106 = vsel %vm1078, %v1071, %v736
      %v1108 = vsel %vm1078, %v1074, %v738
      %v1110 = vsel %vm1078, %v1077, %v740
      %vm1111 = vcmask 97280
      %v1113 = vsel %vm1111, %v1080, %v758
      %v1115 = vsel %vm1111, %v1082, %v760
      %v1117 = vsel %vm1111, %v1084, %v762
      %v1119 = vsel %vm1111, %v1086, %v764
      %v1121 = vsel %vm1111, %v1088, %v766
      %v1123 = vsel %vm1111, %v1090, %v768
      %v1125 = vsel %vm1111, %v1092, %v770
      %v1127 = vsel %vm1111, %v1094, %v772
      %v1129 = vsel %vm1111, %v1096, %v774
      %v1131 = vsel %vm1111, %v1098, %v776
      %v1133 = vsel %vm1111, %v1100, %v778
      %v1135 = vsel %vm1111, %v1102, %v780
      %v1137 = vsel %vm1111, %v1104, %v782
      %v1139 = vsel %vm1111, %v1106, %v784
      %v1141 = vsel %vm1111, %v1108, %v786
      %v1143 = vsel %vm1111, %v1110, %v788
      %vm1144 = vcmask 130048
      %v1146 = vsel %vm1144, %v1113, %v806
      %v1148 = vsel %vm1144, %v1115, %v808
      %v1150 = vsel %vm1144, %v1117, %v810
      %v1152 = vsel %vm1144, %v1119, %v812
      %v1154 = vsel %vm1144, %v1121, %v814
      %v1156 = vsel %vm1144, %v1123, %v816
      %v1158 = vsel %vm1144, %v1125, %v818
      %v1160 = vsel %vm1144, %v1127, %v820
      %v1162 = vsel %vm1144, %v1129, %v822
      %v1164 = vsel %vm1144, %v1131, %v824
      %v1166 = vsel %vm1144, %v1133, %v826
      %v1168 = vsel %vm1144, %v1135, %v828
      %v1170 = vsel %vm1144, %v1137, %v830
      %v1172 = vsel %vm1144, %v1139, %v832
      %v1174 = vsel %vm1144, %v1141, %v834
      %v1176 = vsel %vm1144, %v1143, %v836
      %vm1177 = vcmask 162816
      %v1179 = vsel %vm1177, %v1146, %v854
      %v1181 = vsel %vm1177, %v1148, %v856
      %v1183 = vsel %vm1177, %v1150, %v858
      %v1185 = vsel %vm1177, %v1152, %v860
      %v1187 = vsel %vm1177, %v1154, %v862
      %v1189 = vsel %vm1177, %v1156, %v864
      %v1191 = vsel %vm1177, %v1158, %v866
      %v1193 = vsel %vm1177, %v1160, %v868
      %v1195 = vsel %vm1177, %v1162, %v870
      %v1197 = vsel %vm1177, %v1164, %v872
      %v1199 = vsel %vm1177, %v1166, %v874
      %v1201 = vsel %vm1177, %v1168, %v876
      %v1203 = vsel %vm1177, %v1170, %v878
      %v1205 = vsel %vm1177, %v1172, %v880
      %v1207 = vsel %vm1177, %v1174, %v882
      %v1209 = vsel %vm1177, %v1176, %v884
      %vm1210 = vcmask 195584
      %v1212 = vsel %vm1210, %v1179, %v902
      %v1214 = vsel %vm1210, %v1181, %v904
      %v1216 = vsel %vm1210, %v1183, %v906
      %v1218 = vsel %vm1210, %v1185, %v908
      %v1220 = vsel %vm1210, %v1187, %v910
      %v1222 = vsel %vm1210, %v1189, %v912
      %v1224 = vsel %vm1210, %v1191, %v914
      %v1226 = vsel %vm1210, %v1193, %v916
      %v1228 = vsel %vm1210, %v1195, %v918
      %v1230 = vsel %vm1210, %v1197, %v920
      %v1232 = vsel %vm1210, %v1199, %v922
      %v1234 = vsel %vm1210, %v1201, %v924
      %v1236 = vsel %vm1210, %v1203, %v926
      %v1238 = vsel %vm1210, %v1205, %v928
      %v1240 = vsel %vm1210, %v1207, %v930
      %v1242 = vsel %vm1210, %v1209, %v932
      %vm1243 = vcmask 228352
      %v1245 = vsel %vm1243, %v1212, %v950
      %v1247 = vsel %vm1243, %v1214, %v952
      %v1249 = vsel %vm1243, %v1216, %v954
      %v1251 = vsel %vm1243, %v1218, %v956
      %v1253 = vsel %vm1243, %v1220, %v958
      %v1255 = vsel %vm1243, %v1222, %v960
      %v1257 = vsel %vm1243, %v1224, %v962
      %v1259 = vsel %vm1243, %v1226, %v964
      %v1261 = vsel %vm1243, %v1228, %v966
      %v1263 = vsel %vm1243, %v1230, %v968
      %v1265 = vsel %vm1243, %v1232, %v970
      %v1267 = vsel %vm1243, %v1234, %v972
      %v1269 = vsel %vm1243, %v1236, %v974
      %v1271 = vsel %vm1243, %v1238, %v976
      %v1273 = vsel %vm1243, %v1240, %v978
      %v1275 = vsel %vm1243, %v1242, %v980
      %vm1276 = vcmask 261120
      %v1278 = vsel %vm1276, %v1245, %v998
      %v1280 = vsel %vm1276, %v1247, %v1000
      %v1282 = vsel %vm1276, %v1249, %v1002
      %v1284 = vsel %vm1276, %v1251, %v1004
      %v1286 = vsel %vm1276, %v1253, %v1006
      %v1288 = vsel %vm1276, %v1255, %v1008
      %v1290 = vsel %vm1276, %v1257, %v1010
      %v1292 = vsel %vm1276, %v1259, %v1012
      %v1294 = vsel %vm1276, %v1261, %v1014
      %v1296 = vsel %vm1276, %v1263, %v1016
      %v1298 = vsel %vm1276, %v1265, %v1018
      %v1300 = vsel %vm1276, %v1267, %v1020
      %v1302 = vsel %vm1276, %v1269, %v1022
      %v1304 = vsel %vm1276, %v1271, %v1024
      %v1306 = vsel %vm1276, %v1273, %v1026
      %v1308 = vsel %vm1276, %v1275, %v1028
      %v1309 = vld [vmem:[%s1] sm:$0xf]
      %v1310 = vld [vmem:[%s1 + $0x4] sm:$0xf]
      %v1311 = vld [vmem:[%s1 + $0x8] sm:$0xf]
      %v1312 = vld [vmem:[%s1 + $0xc] sm:$0xf]
      %v1313 = vld [vmem:[%s1 + $0x10] sm:$0x3]
      %v1314 = vld [vmem:[%s2] sm:$0x1]
      %v1316 = vlaneseq
      %v1317 = vshrl.u32 %v1316, 7
      %v1318 = vsub.s32 0, %v1317
      %v1319 = vrot.slane %v1314, %v1318
      %v1326 = vunpack.c.l.b16 %v1309
      %v1327 = vunpack.c.l.b16 %v1310
      %v1328 = vunpack.c.l.b16 %v1311
      %v1329 = vunpack.c.l.b16 %v1312
      %v1330 = vunpack.c.l.b16 %v1313
      %v1331 = vpack.c.b16 %v1327, %v1326
      %v1332 = vpack.c.b16 %v1329, %v1328
      %v1333 = vpack.c.b16 %v1330, %v1330
      %vm1336 = vcmask 293888
      %v1337 = vsel %vm1336, %v1278, 0
      %v1339 = vsel %vm1336, %v1280, 0
      %v1341 = vsel %vm1336, %v1282, 0
      %v1343 = vsel %vm1336, %v1284, 0
      %v1345 = vsel %vm1336, %v1286, 0
      %v1347 = vsel %vm1336, %v1288, 0
      %v1349 = vsel %vm1336, %v1290, 0
      %v1351 = vsel %vm1336, %v1292, 0
      %v1353 = vsel %vm1336, %v1294, 0
      %v1355 = vsel %vm1336, %v1296, 0
      %v1357 = vsel %vm1336, %v1298, 0
      %v1359 = vsel %vm1336, %v1300, 0
      %v1361 = vsel %vm1336, %v1302, 0
      %v1363 = vsel %vm1336, %v1304, 0
      %v1365 = vsel %vm1336, %v1306, 0
      %v1367 = vsel %vm1336, %v1308, 0
      %vm1369 = vcmask 1041408
      %v1371 = vsel %vm1369, %v1333, 0
      %1373 = vmatprep.subr.bf16.mxu0 0
      %1374 = vmatpush1.bf16.msra.mxu0 %v1331
      %1375 = vmatprep.subr.bf16.mxu0 0
      %1376 = vmatpush1.bf16.msra.mxu0 %v1332
      %1377 = vmatprep.subr.bf16.mxu0 0
      %1378 = vmatpush1.bf16.msra.mxu0 %v1371
      %1379 = vmatprep.subr.bf16.mxu0 0
      %1380 = vmatpush1.bf16.msra.mxu0 0
      %1381 = vmatprep.subr.bf16.mxu0 0
      %1382 = vmatpush1.bf16.msra.mxu0 0
      %1383 = vmatprep.subr.bf16.mxu0 0
      %1384 = vmatpush1.bf16.msra.mxu0 0
      %1385 = vmatprep.subr.bf16.mxu0 0
      %1386 = vmatpush1.bf16.msra.mxu0 0
      %1387 = vmatprep.subr.bf16.mxu0 0
      %1388 = vmatpush1.bf16.msra.mxu0 0
      %1389 = vmatprep.subr.bf16.mxu0 0
      %1390 = vmatpush1.bf16.msra.mxu0 0
      %1391 = vmatprep.subr.bf16.mxu0 0
      %1392 = vmatpush1.bf16.msra.mxu0 0
      %1393 = vmatprep.subr.bf16.mxu0 0
      %1394 = vmatpush1.bf16.msra.mxu0 0
      %1395 = vmatprep.subr.bf16.mxu0 0
      %1396 = vmatpush1.bf16.msra.mxu0 0
      %1397 = vmatprep.subr.bf16.mxu0 0
      %1398 = vmatpush1.bf16.msra.mxu0 0
      %1399 = vmatprep.subr.bf16.mxu0 0
      %1400 = vmatpush1.bf16.msra.mxu0 0
      %1401 = vmatprep.subr.bf16.mxu0 0
      %1402 = vmatpush1.bf16.msra.mxu0 0
      %1403 = vmatprep.subr.bf16.mxu0 0
      %1404 = vmatpush1.bf16.msra.mxu0 0
      %1405 = vmatprep.mubr.bf16.mxu0 0
      %1406 = vmatmul.mubr.bf16.gmra.mrb[0].mxu0 %v1337
      %v1407 = vpop.f32.mrb[0].mxu0
      %v1408 = vadd.f32 %v1319, %v1407
      %v1409 = vpop.f32.mrb[0].mxu0
      %v1410 = vpop.f32.mrb[0].mxu0
      %v1411 = vadd.f32 %v1319, %v1410
      %v1412 = vpop.f32.mrb[0].mxu0
      %1413 = vmatprep.mubr.bf16.mxu0 0
      %1414 = vmatmul.mubr.bf16.gmra.mrb[0].mxu0 %v1339
      %v1415 = vpop.f32.mrb[0].mxu0
      %v1416 = vadd.f32 %v1319, %v1415
      %v1417 = vpop.f32.mrb[0].mxu0
      %v1418 = vpop.f32.mrb[0].mxu0
      %v1419 = vadd.f32 %v1319, %v1418
      %v1420 = vpop.f32.mrb[0].mxu0
      %1421 = vmatprep.mubr.bf16.mxu0 0
      %1422 = vmatmul.mubr.bf16.gmra.mrb[0].mxu0 %v1341
      %v1423 = vpop.f32.mrb[0].mxu0
      %v1424 = vadd.f32 %v1319, %v1423
      %v1425 = vpop.f32.mrb[0].mxu0
      %v1426 = vpop.f32.mrb[0].mxu0
      %v1427 = vadd.f32 %v1319, %v1426
      %v1428 = vpop.f32.mrb[0].mxu0
      %1429 = vmatprep.mubr.bf16.mxu0 0
      %1430 = vmatmul.mubr.bf16.gmra.mrb[0].mxu0 %v1343
      %v1431 = vpop.f32.mrb[0].mxu0
      %v1432 = vadd.f32 %v1319, %v1431
      %v1433 = vpop.f32.mrb[0].mxu0
      %v1434 = vpop.f32.mrb[0].mxu0
      %v1435 = vadd.f32 %v1319, %v1434
      %v1436 = vpop.f32.mrb[0].mxu0
      %1437 = vmatprep.mubr.bf16.mxu0 0
      %1438 = vmatmul.mubr.bf16.gmra.mrb[0].mxu0 %v1345
      %v1439 = vpop.f32.mrb[0].mxu0
      %v1440 = vadd.f32 %v1319, %v1439
      %v1441 = vpop.f32.mrb[0].mxu0
      %v1442 = vpop.f32.mrb[0].mxu0
      %v1443 = vadd.f32 %v1319, %v1442
      %v1444 = vpop.f32.mrb[0].mxu0
      %1445 = vmatprep.mubr.bf16.mxu0 0
      %1446 = vmatmul.mubr.bf16.gmra.mrb[0].mxu0 %v1347
      %v1447 = vpop.f32.mrb[0].mxu0
      %v1448 = vadd.f32 %v1319, %v1447
      %v1449 = vpop.f32.mrb[0].mxu0
      %v1450 = vpop.f32.mrb[0].mxu0
      %v1451 = vadd.f32 %v1319, %v1450
      %v1452 = vpop.f32.mrb[0].mxu0
      %1453 = vmatprep.mubr.bf16.mxu0 0
      %1454 = vmatmul.mubr.bf16.gmra.mrb[0].mxu0 %v1349
      %v1455 = vpop.f32.mrb[0].mxu0
      %v1456 = vadd.f32 %v1319, %v1455
      %v1457 = vpop.f32.mrb[0].mxu0
      %v1458 = vpop.f32.mrb[0].mxu0
      %v1459 = vadd.f32 %v1319, %v1458
      %v1460 = vpop.f32.mrb[0].mxu0
      %1461 = vmatprep.mubr.bf16.mxu0 0
      %1462 = vmatmul.mubr.bf16.gmra.mrb[0].mxu0 %v1351
      %v1463 = vpop.f32.mrb[0].mxu0
      %v1464 = vadd.f32 %v1319, %v1463
      %v1465 = vpop.f32.mrb[0].mxu0
      %v1466 = vpop.f32.mrb[0].mxu0
      %v1467 = vadd.f32 %v1319, %v1466
      %v1468 = vpop.f32.mrb[0].mxu0
      %1469 = vmatprep.mubr.bf16.mxu0 0
      %1470 = vmatmul.mubr.bf16.gmra.mrb[0].mxu0 %v1353
      %v1471 = vpop.f32.mrb[0].mxu0
      %v1472 = vadd.f32 %v1319, %v1471
      %v1473 = vpop.f32.mrb[0].mxu0
      %v1474 = vpop.f32.mrb[0].mxu0
      %v1475 = vadd.f32 %v1319, %v1474
      %v1476 = vpop.f32.mrb[0].mxu0
      %1477 = vmatprep.mubr.bf16.mxu0 0
      %1478 = vmatmul.mubr.bf16.gmra.mrb[0].mxu0 %v1355
      %v1479 = vpop.f32.mrb[0].mxu0
      %v1480 = vadd.f32 %v1319, %v1479
      %v1481 = vpop.f32.mrb[0].mxu0
      %v1482 = vpop.f32.mrb[0].mxu0
      %v1483 = vadd.f32 %v1319, %v1482
      %v1484 = vpop.f32.mrb[0].mxu0
      %1485 = vmatprep.mubr.bf16.mxu0 0
      %1486 = vmatmul.mubr.bf16.gmra.mrb[0].mxu0 %v1357
      %v1487 = vpop.f32.mrb[0].mxu0
      %v1488 = vadd.f32 %v1319, %v1487
      %v1489 = vpop.f32.mrb[0].mxu0
      %v1490 = vpop.f32.mrb[0].mxu0
      %v1491 = vadd.f32 %v1319, %v1490
      %v1492 = vpop.f32.mrb[0].mxu0
      %1493 = vmatprep.mubr.bf16.mxu0 0
      %1494 = vmatmul.mubr.bf16.gmra.mrb[0].mxu0 %v1359
      %v1495 = vpop.f32.mrb[0].mxu0
      %v1496 = vadd.f32 %v1319, %v1495
      %v1497 = vpop.f32.mrb[0].mxu0
      %v1498 = vpop.f32.mrb[0].mxu0
      %v1499 = vadd.f32 %v1319, %v1498
      %v1500 = vpop.f32.mrb[0].mxu0
      %1501 = vmatprep.mubr.bf16.mxu0 0
      %1502 = vmatmul.mubr.bf16.gmra.mrb[0].mxu0 %v1361
      %v1503 = vpop.f32.mrb[0].mxu0
      %v1504 = vadd.f32 %v1319, %v1503
      %v1505 = vpop.f32.mrb[0].mxu0
      %v1506 = vpop.f32.mrb[0].mxu0
      %v1507 = vadd.f32 %v1319, %v1506
      %v1508 = vpop.f32.mrb[0].mxu0
      %1509 = vmatprep.mubr.bf16.mxu0 0
      %1510 = vmatmul.mubr.bf16.gmra.mrb[0].mxu0 %v1363
      %v1511 = vpop.f32.mrb[0].mxu0
      %v1512 = vadd.f32 %v1319, %v1511
      %v1513 = vpop.f32.mrb[0].mxu0
      %v1514 = vpop.f32.mrb[0].mxu0
      %v1515 = vadd.f32 %v1319, %v1514
      %v1516 = vpop.f32.mrb[0].mxu0
      %1517 = vmatprep.mubr.bf16.mxu0 0
      %1518 = vmatmul.mubr.bf16.gmra.mrb[0].mxu0 %v1365
      %v1519 = vpop.f32.mrb[0].mxu0
      %v1520 = vadd.f32 %v1319, %v1519
      %v1521 = vpop.f32.mrb[0].mxu0
      %v1522 = vpop.f32.mrb[0].mxu0
      %v1523 = vadd.f32 %v1319, %v1522
      %v1524 = vpop.f32.mrb[0].mxu0
      %1525 = vmatprep.mubr.bf16.mxu0 0
      %1526 = vmatmul.mubr.bf16.gmra.mrb[0].mxu0 %v1367
      %v1527 = vpop.f32.mrb[0].mxu0
      %v1528 = vadd.f32 %v1319, %v1527
      %v1529 = vpop.f32.mrb[0].mxu0
      %v1530 = vpop.f32.mrb[0].mxu0
      %v1531 = vadd.f32 %v1319, %v1530
      %v1532 = vpop.f32.mrb[0].mxu0
      %1533 = vdwg.mxu0
      %v1534 = vmax.f32 %v1408, 0.0
      %v1535 = vmax.f32 %v1411, 0.0
      %v1536 = vmax.f32 %v1416, 0.0
      %v1537 = vmax.f32 %v1419, 0.0
      %v1538 = vmax.f32 %v1424, 0.0
      %v1539 = vmax.f32 %v1427, 0.0
      %v1540 = vmax.f32 %v1432, 0.0
      %v1541 = vmax.f32 %v1435, 0.0
      %v1542 = vmax.f32 %v1440, 0.0
      %v1543 = vmax.f32 %v1443, 0.0
      %v1544 = vmax.f32 %v1448, 0.0
      %v1545 = vmax.f32 %v1451, 0.0
      %v1546 = vmax.f32 %v1456, 0.0
      %v1547 = vmax.f32 %v1459, 0.0
      %v1548 = vmax.f32 %v1464, 0.0
      %v1549 = vmax.f32 %v1467, 0.0
      %v1550 = vmax.f32 %v1472, 0.0
      %v1551 = vmax.f32 %v1475, 0.0
      %v1552 = vmax.f32 %v1480, 0.0
      %v1553 = vmax.f32 %v1483, 0.0
      %v1554 = vmax.f32 %v1488, 0.0
      %v1555 = vmax.f32 %v1491, 0.0
      %v1556 = vmax.f32 %v1496, 0.0
      %v1557 = vmax.f32 %v1499, 0.0
      %v1558 = vmax.f32 %v1504, 0.0
      %v1559 = vmax.f32 %v1507, 0.0
      %v1560 = vmax.f32 %v1512, 0.0
      %v1561 = vmax.f32 %v1515, 0.0
      %v1562 = vmax.f32 %v1520, 0.0
      %v1563 = vmax.f32 %v1523, 0.0
      %v1564 = vmax.f32 %v1528, 0.0
      %v1565 = vmax.f32 %v1531, 0.0
      %1598 = vrot.lane.b32.xlu0 %v1534, 4
      %v1599 = vpop.permute.xlu0 %1598
      %1600 = vrot.lane.b32.xlu0 %v1535, 4
      %v1601 = vpop.permute.xlu0 %1600
      %1602 = vrot.lane.b32.xlu0 %v1536, 4
      %v1603 = vpop.permute.xlu0 %1602
      %1604 = vrot.lane.b32.xlu0 %v1537, 4
      %v1605 = vpop.permute.xlu0 %1604
      %1606 = vrot.lane.b32.xlu0 %v1538, 4
      %v1607 = vpop.permute.xlu0 %1606
      %1608 = vrot.lane.b32.xlu0 %v1539, 4
      %v1609 = vpop.permute.xlu0 %1608
      %1610 = vrot.lane.b32.xlu0 %v1540, 4
      %v1611 = vpop.permute.xlu0 %1610
      %1612 = vrot.lane.b32.xlu0 %v1541, 4
      %v1613 = vpop.permute.xlu0 %1612
      %1614 = vrot.lane.b32.xlu0 %v1542, 4
      %v1615 = vpop.permute.xlu0 %1614
      %1616 = vrot.lane.b32.xlu0 %v1543, 4
      %v1617 = vpop.permute.xlu0 %1616
      %1618 = vrot.lane.b32.xlu0 %v1544, 4
      %v1619 = vpop.permute.xlu0 %1618
      %1620 = vrot.lane.b32.xlu0 %v1545, 4
      %v1621 = vpop.permute.xlu0 %1620
      %1622 = vrot.lane.b32.xlu0 %v1546, 4
      %v1623 = vpop.permute.xlu0 %1622
      %1624 = vrot.lane.b32.xlu0 %v1547, 4
      %v1625 = vpop.permute.xlu0 %1624
      %1626 = vrot.lane.b32.xlu0 %v1548, 4
      %v1627 = vpop.permute.xlu0 %1626
      %1628 = vrot.lane.b32.xlu0 %v1549, 4
      %v1629 = vpop.permute.xlu0 %1628
      %1630 = vrot.lane.b32.xlu0 %v1550, 4
      %v1631 = vpop.permute.xlu0 %1630
      %1632 = vrot.lane.b32.xlu0 %v1551, 4
      %v1633 = vpop.permute.xlu0 %1632
      %1634 = vrot.lane.b32.xlu0 %v1552, 4
      %v1635 = vpop.permute.xlu0 %1634
      %1636 = vrot.lane.b32.xlu0 %v1553, 4
      %v1637 = vpop.permute.xlu0 %1636
      %1638 = vrot.lane.b32.xlu0 %v1554, 4
      %v1639 = vpop.permute.xlu0 %1638
      %1640 = vrot.lane.b32.xlu0 %v1555, 4
      %v1641 = vpop.permute.xlu0 %1640
      %1642 = vrot.lane.b32.xlu0 %v1556, 4
      %v1643 = vpop.permute.xlu0 %1642
      %1644 = vrot.lane.b32.xlu0 %v1557, 4
      %v1645 = vpop.permute.xlu0 %1644
      %1646 = vrot.lane.b32.xlu0 %v1558, 4
      %v1647 = vpop.permute.xlu0 %1646
      %1648 = vrot.lane.b32.xlu0 %v1559, 4
      %v1649 = vpop.permute.xlu0 %1648
      %1650 = vrot.lane.b32.xlu0 %v1560, 4
      %v1651 = vpop.permute.xlu0 %1650
      %1652 = vrot.lane.b32.xlu0 %v1561, 4
      %v1653 = vpop.permute.xlu0 %1652
      %1654 = vrot.lane.b32.xlu0 %v1562, 4
      %v1655 = vpop.permute.xlu0 %1654
      %1656 = vrot.lane.b32.xlu0 %v1563, 4
      %v1657 = vpop.permute.xlu0 %1656
      %1658 = vrot.lane.b32.xlu0 %v1564, 4
      %v1659 = vpop.permute.xlu0 %1658
      %1660 = vrot.lane.b32.xlu0 %v1565, 4
      %v1661 = vpop.permute.xlu0 %1660
      %v1694 = vsel %vm1029, %v404, %v1599
      %v1695 = vsel %vm1029, %v405, %v1601
      %v1696 = vsel %vm1029, %v406, %v1603
      %v1697 = vsel %vm1029, %v407, %v1605
      %v1698 = vsel %vm1029, %v408, %v1607
      %v1699 = vsel %vm1029, %v409, %v1609
      %v1700 = vsel %vm1029, %v410, %v1611
      %v1701 = vsel %vm1029, %v411, %v1613
      %v1702 = vsel %vm1029, %v412, %v1615
      %v1703 = vsel %vm1029, %v413, %v1617
      %v1704 = vsel %vm1029, %v414, %v1619
      %v1705 = vsel %vm1029, %v415, %v1621
      %v1706 = vsel %vm1029, %v416, %v1623
      %v1707 = vsel %vm1029, %v417, %v1625
      %v1708 = vsel %vm1029, %v418, %v1627
      %v1709 = vsel %vm1029, %v419, %v1629
      %v1710 = vsel %vm1029, %v420, %v1631
      %v1711 = vsel %vm1029, %v421, %v1633
      %v1712 = vsel %vm1029, %v422, %v1635
      %v1713 = vsel %vm1029, %v423, %v1637
      %v1714 = vsel %vm1029, %v424, %v1639
      %v1715 = vsel %vm1029, %v425, %v1641
      %v1716 = vsel %vm1029, %v426, %v1643
      %v1717 = vsel %vm1029, %v427, %v1645
      %v1718 = vsel %vm1029, %v428, %v1647
      %v1719 = vsel %vm1029, %v429, %v1649
      %v1720 = vsel %vm1029, %v430, %v1651
      %v1721 = vsel %vm1029, %v431, %v1653
      %v1722 = vsel %vm1029, %v432, %v1655
      %v1723 = vsel %vm1029, %v433, %v1657
      %v1724 = vsel %vm1029, %v434, %v1659
      %v1725 = vsel %vm1029, %v435, %v1661
      %1726 = vst.msk [vmem:[%s208] sm:$0xff] %vm1111, %v1694
      %1727 = vst.msk [vmem:[%s208 + $0x8] sm:$0xff] %vm1111, %v1695
      %1728 = vst.msk [vmem:[%s208 + $0x10] sm:$0xff] %vm1111, %v1696
      %1729 = vst.msk [vmem:[%s208 + $0x18] sm:$0xff] %vm1111, %v1697
      %1730 = vst.msk [vmem:[%s208 + $0x20] sm:$0xff] %vm1111, %v1698
      %1731 = vst.msk [vmem:[%s208 + $0x28] sm:$0xff] %vm1111, %v1699
      %1732 = vst.msk [vmem:[%s208 + $0x30] sm:$0xff] %vm1111, %v1700
      %1733 = vst.msk [vmem:[%s208 + $0x38] sm:$0xff] %vm1111, %v1701
      %1734 = vst.msk [vmem:[%s208 + $0x40] sm:$0xff] %vm1111, %v1702
      %1735 = vst.msk [vmem:[%s208 + $0x48] sm:$0xff] %vm1111, %v1703
      %1736 = vst.msk [vmem:[%s208 + $0x50] sm:$0xff] %vm1111, %v1704
      %1737 = vst.msk [vmem:[%s208 + $0x58] sm:$0xff] %vm1111, %v1705
      %1738 = vst.msk [vmem:[%s208 + $0x60] sm:$0xff] %vm1111, %v1706
      %1739 = vst.msk [vmem:[%s208 + $0x68] sm:$0xff] %vm1111, %v1707
      %1740 = vst.msk [vmem:[%s208 + $0x70] sm:$0xff] %vm1111, %v1708
      %1741 = vst.msk [vmem:[%s208 + $0x78] sm:$0xff] %vm1111, %v1709
      %1742 = vst.msk [vmem:[%s208 + $0x80] sm:$0xff] %vm1111, %v1710
      %1743 = vst.msk [vmem:[%s208 + $0x88] sm:$0xff] %vm1111, %v1711
      %1744 = vst.msk [vmem:[%s208 + $0x90] sm:$0xff] %vm1111, %v1712
      %1745 = vst.msk [vmem:[%s208 + $0x98] sm:$0xff] %vm1111, %v1713
      %1746 = vst.msk [vmem:[%s208 + $0xa0] sm:$0xff] %vm1111, %v1714
      %1747 = vst.msk [vmem:[%s208 + $0xa8] sm:$0xff] %vm1111, %v1715
      %1748 = vst.msk [vmem:[%s208 + $0xb0] sm:$0xff] %vm1111, %v1716
      %1749 = vst.msk [vmem:[%s208 + $0xb8] sm:$0xff] %vm1111, %v1717
      %1750 = vst.msk [vmem:[%s208 + $0xc0] sm:$0xff] %vm1111, %v1718
      %1751 = vst.msk [vmem:[%s208 + $0xc8] sm:$0xff] %vm1111, %v1719
      %1752 = vst.msk [vmem:[%s208 + $0xd0] sm:$0xff] %vm1111, %v1720
      %1753 = vst.msk [vmem:[%s208 + $0xd8] sm:$0xff] %vm1111, %v1721
      %1754 = vst.msk [vmem:[%s208 + $0xe0] sm:$0xff] %vm1111, %v1722
      %1755 = vst.msk [vmem:[%s208 + $0xe8] sm:$0xff] %vm1111, %v1723
      %1756 = vst.msk [vmem:[%s208 + $0xf0] sm:$0xff] %vm1111, %v1724
      %1757 = vst.msk [vmem:[%s208 + $0xf8] sm:$0xff] %vm1111, %v1725
      %s1758 = smul.u32 16, %s19
      %p1759 = scmp.lt.s32.totalorder %s18, 1
      %s1760 = scalar_select %p1759, %s18, 1
      %p1761 = scmp.lt.s32.totalorder %s1758, 15
      %s1762 = scalar_select %p1761, %s1758, 15
      %s1763 = smul.addr %s1762, 2
      %s1764 = smul.addr %s1760, 32
      %s1765 = sadd.s32 %s1763, %s1764
      %s1766 = smul.addr %s1765, 8
      %s1767 = scalar_lea.vmem %s3, %s1766
      // Predicated region
      $region33: #{dense_conv2d.1} parent=31 // pred_check
        %p1768 = pneg %p116
      $region34: #{dense_conv2d.1} parent=31 // pred_check_branch
        %1770 = sbr.rel (%p1768) target = $region36
      $region35: #{dense_conv2d.1} parent=31 // pred_region
        %s1771 = smul.u32 16, %s19
      $region36: #{dense_conv2d.1} parent=31 // pred_fallthru
        _
    $region32: #{dense_conv2d.1} parent=5 // pred_fallthru
      _
    %p1772 = scmp.le.s32.totalorder 2, %s9
    // Predicated region
    $region37: #{dense_conv2d.1} parent=5 // pred_check
      %p1773 = pneg %p1772
    $region38: #{dense_conv2d.1} parent=5 // pred_check_branch
      %1775 = sbr.rel (%p1773) target = $region40
    $region39: #{dense_conv2d.1} parent=5 // pred_region
      %s1776 = ssub.s32 %s9, 2
      // Predicated region
      $region41: #{dense_conv2d.1} parent=39 // pred_check
        %p1777 = pneg %p122
      $region42: #{dense_conv2d.1} parent=39 // pred_check_branch
        %1779 = sbr.rel (%p1777) target = $region44
      $region43: #{dense_conv2d.1} parent=39 // pred_region
        %s1780 = smul.u32 16, %s21
        %p1781 = scmp.lt.s32.totalorder %s20, 1
        %s1782 = scalar_select %p1781, %s20, 1
        %p1783 = scmp.lt.s32.totalorder %s1780, 15
        %s1784 = scalar_select %p1783, %s1780, 15
        %s1785 = smul.addr %s1784, 2
        %s1786 = smul.addr %s1782, 32
        %s1787 = sadd.s32 %s1785, %s1786
        %s1788 = smul.addr %s1787, 8
        %s1789 = scalar_lea.vmem %s3, %s1788
      $region44: #{dense_conv2d.1} parent=39 // pred_fallthru
        _
    $region40: #{dense_conv2d.1} parent=5 // pred_fallthru
      _
  $region6: #{dense_conv2d.1} parent=0 // loop_footer
    %s13 = sadd.s32 1, %s9
  $region7: #{dense_conv2d.1} parent=0 // loop_footer_branch
    %8 = sbr.rel target = $region3
  $region8: #{dense_conv2d.1} parent=0 // loop_exit
    _

</llo_original>
